<compile_context>
chip_gen: v5e
topology: v5e:2x2
jax: 0.10.0
libtpu: 0.0.40
codegen_flags: <defaults>
</compile_context>

<pallas_src>
import functools

import jax
import jax.numpy as jnp
from jax.experimental import pallas as pl
from jax.experimental.pallas import tpu as pltpu


def _round_up(n, m):
    return ((n + m - 1) // m) * m


def _tpu_generation():
    """Best-effort (chip-gated) hardware query: (is_v7x, vmem_capacity_bytes)."""
    is_v7 = False
    try:
        kind = str(jax.devices()[0].device_kind).lower()
        is_v7 = ("v7" in kind) or ("tpu7" in kind)
    except Exception:
        pass
    try:
        vmem_cap = int(pltpu.get_tpu_info().vmem_capacity_bytes)
    except Exception:
        vmem_cap = (64 << 20) if is_v7 else (128 << 20)  # v7x: 64 MiB/TC, else 128 MiB
    return is_v7, vmem_cap


def _choose_tm(M, d_in, d_red, x_bytes, out_bytes, budget,
               max_tm=1024, split_for_two_cores=False):
    """Largest MXU-friendly row tile whose double-buffered tiles fit `budget`."""
    m8 = _round_up(M, 8)
    tm = min(max_tm, m8)
    tm = _round_up(tm, 8)
    per_row = 2 * (d_in * x_bytes + d_red * out_bytes)  # 2 = double buffering
    while tm > 8 and tm * per_row > budget:
        tm = max(8, _round_up(tm // 2, 8))
    # Only split the grid when there really are 2 TensorCores (v7x); on
    # single-TC v5e/v6e the grid is a serial loop and splitting is pure overhead.
    if split_for_two_cores and pl.cdiv(m8, tm) < 2 and m8 >= 16:
        tm = max(8, _round_up(pl.cdiv(m8, 2), 8))
    return min(tm, m8)


def _ann_kernel_fc0(x_ref, w0_ref, b0_ref, o_ref):
    """n_layers == 1: just fc0 (x @ W0 + b0) on one row tile."""
    x_bf = x_ref[...].astype(jnp.bfloat16)          # in-kernel cast, hidden under DMA
    h = jnp.dot(x_bf, w0_ref[...], preferred_element_type=jnp.float32)
    o_ref[...] = (h + b0_ref[...]).astype(o_ref.dtype)


def _ann_kernel_deep(x_ref, w0_ref, b0_ref, w_ref, b_ref, o_ref, *, n_layers):
    """n_layers > 1: fc0 then (n_layers-1) x [relu -> fc] on one row tile."""
    x_bf = x_ref[...].astype(jnp.bfloat16)
    h = jnp.dot(x_bf, w0_ref[...], preferred_element_type=jnp.float32) + b0_ref[...]
    w = w_ref[...]                                          # hoisted out of the loop
    b_bcast = jnp.broadcast_to(b_ref[...], h.shape)         # broadcast once, not per layer
    for _ in range(n_layers - 1):                           # statically unrolled
        h = jnp.maximum(h, 0.0)                             # ReLU (dropout == identity)
        h = jnp.dot(h.astype(jnp.bfloat16), w,
                    preferred_element_type=jnp.float32) + b_bcast
    o_ref[...] = h.astype(o_ref.dtype)


def _build_call(m_pad, d_in, d_red, tm, n_layers, out_dtype, vmem_limit,
                single_buffer_weights):
    # Constant-index-map operands (weights/biases) are VMEM-resident; request
    # single buffering for them to halve their footprint (matters at the real
    # VSFA input_size=4096 on v7x's 64 MiB VMEM).
    w_mode = {"pipeline_mode": pl.Buffered(1)} if single_buffer_weights else {}

    in_specs = [
        pl.BlockSpec((tm, d_in), lambda i: (i, 0)),               # x row tile (streamed, f32)
        pl.BlockSpec((d_in, d_red), lambda i: (0, 0), **w_mode),  # W0 (resident, bf16)
        pl.BlockSpec((1, d_red), lambda i: (0, 0), **w_mode),     # b0 (resident, f32)
    ]
    if n_layers > 1:
        in_specs += [
            pl.BlockSpec((d_red, d_red), lambda i: (0, 0), **w_mode),  # W (resident, bf16)
            pl.BlockSpec((1, d_red), lambda i: (0, 0), **w_mode),      # b (resident, f32)
        ]
        kernel = functools.partial(_ann_kernel_deep, n_layers=n_layers)
    else:
        kernel = _ann_kernel_fc0

    return pl.pallas_call(
        kernel,
        out_shape=jax.ShapeDtypeStruct((m_pad, d_red), out_dtype),
        grid_spec=pltpu.PrefetchScalarGridSpec(
            num_scalar_prefetch=0,
            grid=(pl.cdiv(m_pad, tm),),   # partial trailing block OK: rows are independent
            in_specs=in_specs,
            out_specs=pl.BlockSpec((tm, d_red), lambda i: (i, 0)),
        ),
        # TODO(synk): on v7x, verify in a trace that both TensorCores pick up row
        # tiles; if not, switch this axis to pltpu.CORE_PARALLEL.
        compiler_params=pltpu.CompilerParams(
            dimension_semantics=("parallel",),
            vmem_limit_bytes=vmem_limit,
        ),
    )


def ann_forward(x, w0, b0, w=None, b=None, *, n_layers=1, tm=None,
                out_dtype=jnp.float32):
    """x: (M, input_size); w0: (input_size, reduced); w: (reduced, reduced).

    Weights are pre-transposed from PyTorch's (out, in) layout to (in, out) so
    the kernel computes plain x @ W + b. Returns (M, reduced) in `out_dtype`.
    """
    M, d_in = x.shape
    d_red = w0.shape[1]
    if n_layers > 1 and (w is None or b is None):
        raise ValueError("w and b are required when n_layers > 1")

    is_v7, vmem_cap = _tpu_generation()
    # Generation-aware scoped-VMEM limit: ~96 MiB on v5e/v6e (128 MiB physical),
    # 48 MiB on v7x (64 MiB physical).
    if vmem_cap >= (96 << 20):
        vmem_limit = 96 << 20
    else:
        vmem_limit = min(48 << 20, max(16 << 20, vmem_cap - (16 << 20)))

    # Resident weight/bias bytes (counted double-buffered, conservative).
    w_bytes = d_in * d_red * 2 + d_red * 4
    if n_layers > 1:
        w_bytes += d_red * d_red * 2 + d_red * 4
    budget = max(8 << 20, vmem_limit - 2 * w_bytes - (8 << 20))

    out_bytes = jnp.dtype(out_dtype).itemsize
    if tm is None:
        tm = _choose_tm(M, d_in, d_red, x_bytes=4, out_bytes=out_bytes,
                        budget=budget, split_for_two_cores=is_v7)

    # Pad rows only to the sublane multiple (<= 7 junk rows); no tile-multiple
    # padding and no extra output copy when M is already a multiple of 8.
    m_pad = _round_up(M, 8)
    x_in = x if m_pad == M else jnp.pad(x, ((0, m_pad - M), (0, 0)))
    tm = min(_round_up(tm, 8), m_pad)

    # bf16 weights (MXU-native), f32 biases; x stays f32 (cast in-kernel).
    args = [x_in, w0.astype(jnp.bfloat16),
            b0.reshape(1, d_red).astype(jnp.float32)]
    if n_layers > 1:
        args += [w.astype(jnp.bfloat16),
                 b.reshape(1, d_red).astype(jnp.float32)]

    try:
        out = _build_call(m_pad, d_in, d_red, tm, n_layers, out_dtype,
                          vmem_limit, single_buffer_weights=True)(*args)
        jax.block_until_ready(out)
    except Exception:
        # Installed JAX rejected pipeline_mode/Buffered(1): fall back to the
        # default double-buffered specs (costs a little VMEM, same result).
        out = _build_call(m_pad, d_in, d_red, tm, n_layers, out_dtype,
                          vmem_limit, single_buffer_weights=False)(*args)

    return out[:M] if m_pad != M else out


def ann_reference(x, w0, b0, w, b, n_layers):
    """Pure-JAX reference mirroring the PyTorch eval-mode forward with the same
    bf16-matmul / f32-accumulate arithmetic as the kernel."""
    h = jnp.dot(x.astype(jnp.bfloat16), w0.astype(jnp.bfloat16),
                preferred_element_type=jnp.float32) + b0.astype(jnp.float32)
    for _ in range(n_layers - 1):
        h = jnp.maximum(h, 0.0)
        h = jnp.dot(h.astype(jnp.bfloat16), w.astype(jnp.bfloat16),
                    preferred_element_type=jnp.float32) + b.astype(jnp.float32)
    return h


if __name__ == "__main__":
    # Small shapes consistent with the module: (batch, seq, input_size).
    # reduced_size=128 (module default) keeps the output store path lane-dense.
    batch, seq = 2, 256
    input_size, reduced_size = 256, 128

    key = jax.random.PRNGKey(0)
    k_x, k_w0, k_b0, k_w, k_b = jax.random.split(key, 5)

    x = jax.random.normal(k_x, (batch, seq, input_size), dtype=jnp.float32)
    # PyTorch Linear stores weight as (out, in); kept pre-transposed to (in, out).
    w0 = jax.random.normal(k_w0, (input_size, reduced_size), jnp.float32) * 0.05
    b0 = jax.random.normal(k_b0, (reduced_size,), jnp.float32) * 0.05
    w = jax.random.normal(k_w, (reduced_size, reduced_size), jnp.float32) * 0.05
    b = jax.random.normal(k_b, (reduced_size,), jnp.float32) * 0.05

    # Flatten leading dims into rows for the kernel (glue in plain JAX).
    x2d = x.reshape(batch * seq, input_size)

    # n_ANNlayers = 1 (module default): fc0 only, no W/b passed at all.
    out1 = ann_forward(x2d, w0, b0, n_layers=1)
    jax.block_until_ready(out1)
    ref1 = ann_reference(x2d, w0, b0, w, b, 1)
    assert jnp.allclose(out1, ref1, atol=5e-3, rtol=5e-3), "mismatch (n_layers=1)"

    # n_ANNlayers = 3: exercises the relu -> fc unrolled loop.
    out3 = ann_forward(x2d, w0, b0, w, b, n_layers=3)
    jax.block_until_ready(out3)
    ref3 = ann_reference(x2d, w0, b0, w, b, 3)
    assert jnp.allclose(out3, ref3, atol=5e-3, rtol=5e-3), "mismatch (n_layers=3)"

    print("KERNEL_OK")
</pallas_src>

<mosaic_0001>
module attributes {stable_mosaic.version = 11 : i64} {
  func.func @_ann_kernel_fc0(%arg0: i32, %arg1: memref<512x256xf32, #tpu.memory_space<vmem>>, %arg2: memref<256x128xbf16, #tpu.memory_space<vmem>>, %arg3: memref<1x128xf32, #tpu.memory_space<vmem>>, %arg4: memref<512x128xf32, #tpu.memory_space<vmem>>) attributes {dimension_semantics = [#tpu.dimension_semantics<parallel>], iteration_bounds = array<i64: 1>, scalar_prefetch = 0 : i64, scratch_operands = 0 : i64, tpu.core_type = #tpu.core_type<tc>, window_params = [{transform_indices = @transform_0, window_bounds = array<i64: 512, 256>}, {pipeline_mode = #tpu.pipeline_mode<synchronous>, transform_indices = @transform_1, window_bounds = array<i64: 256, 128>}, {pipeline_mode = #tpu.pipeline_mode<synchronous>, transform_indices = @transform_2, window_bounds = array<i64: 1, 128>}, {transform_indices = @transform_3, window_bounds = array<i64: 512, 128>}]} {
    %c0 = arith.constant 0 : index
    %c0_0 = arith.constant 0 : index
    %0 = vector.load %arg1[%c0, %c0_0] : memref<512x256xf32, #tpu.memory_space<vmem>>, vector<512x256xf32>
    %1 = arith.truncf %0 : vector<512x256xf32> to vector<512x256xbf16>
    %c0_1 = arith.constant 0 : index
    %c0_2 = arith.constant 0 : index
    %2 = vector.load %arg2[%c0_1, %c0_2] : memref<256x128xbf16, #tpu.memory_space<vmem>>, vector<256x128xbf16>
    %cst = arith.constant dense<0.000000e+00> : vector<512x128xf32>
    %3 = tpu.matmul %1, %2, %cst {dimension_numbers = #tpu.dot_dimension_numbers<[1], [0], [0], [1], [0, 0, 1, 1], [], []>} : vector<512x256xbf16>, vector<256x128xbf16>, vector<512x128xf32> -> vector<512x128xf32>
    %c0_3 = arith.constant 0 : index
    %c0_4 = arith.constant 0 : index
    %4 = vector.load %arg3[%c0_3, %c0_4] : memref<1x128xf32, #tpu.memory_space<vmem>>, vector<1x128xf32>
    %5 = vector.broadcast %4 : vector<1x128xf32> to vector<512x128xf32>
    %6 = arith.addf %3, %5 : vector<512x128xf32>
    %c0_5 = arith.constant 0 : index
    %c0_6 = arith.constant 0 : index
    %7 = vector.load %arg4[%c0_5, %c0_6] : memref<512x128xf32, #tpu.memory_space<vmem>>, vector<512x128xf32>
    tpu.vector_store %arg4[%c0_5, %c0_6], %6 {strides = array<i32>} : memref<512x128xf32, #tpu.memory_space<vmem>>, vector<512x128xf32>,
    return
  }
  func.func @transform_0(%arg0: i32) -> (i32, i32) {
    %c0_i32 = arith.constant 0 : i32
    %c0_i32_0 = arith.constant 0 : i32
    return %arg0, %c0_i32 : i32, i32
  }
  func.func @transform_1(%arg0: i32) -> (i32, i32) {
    %c0_i32 = arith.constant 0 : i32
    %c0_i32_0 = arith.constant 0 : i32
    %c0_i32_1 = arith.constant 0 : i32
    return %c0_i32, %c0_i32_0 : i32, i32
  }
  func.func @transform_2(%arg0: i32) -> (i32, i32) {
    %c0_i32 = arith.constant 0 : i32
    %c0_i32_0 = arith.constant 0 : i32
    %c0_i32_1 = arith.constant 0 : i32
    return %c0_i32, %c0_i32_0 : i32, i32
  }
  func.func @transform_3(%arg0: i32) -> (i32, i32) {
    %c0_i32 = arith.constant 0 : i32
    %c0_i32_0 = arith.constant 0 : i32
    return %arg0, %c0_i32 : i32, i32
  }
}

module attributes {stable_mosaic.version = 11 : i64} {
  func.func @_ann_kernel_fc0(%arg0: i32, %arg1: memref<512x256xf32, #tpu.memory_space<vmem>>, %arg2: memref<256x128xbf16, #tpu.memory_space<vmem>>, %arg3: memref<1x128xf32, #tpu.memory_space<vmem>>, %arg4: memref<512x128xf32, #tpu.memory_space<vmem>>) attributes {dimension_semantics = [#tpu.dimension_semantics<parallel>], iteration_bounds = array<i64: 1>, scalar_prefetch = 0 : i64, scratch_operands = 0 : i64, tpu.core_type = #tpu.core_type<tc>, window_params = [{transform_indices = @transform_0, window_bounds = array<i64: 512, 256>}, {pipeline_mode = #tpu.pipeline_mode<synchronous>, transform_indices = @transform_1, window_bounds = array<i64: 256, 128>}, {pipeline_mode = #tpu.pipeline_mode<synchronous>, transform_indices = @transform_2, window_bounds = array<i64: 1, 128>}, {transform_indices = @transform_3, window_bounds = array<i64: 512, 128>}]} {
    %c0 = arith.constant 0 : index
    %c0_0 = arith.constant 0 : index
    %0 = vector.load %arg1[%c0, %c0_0] : memref<512x256xf32, #tpu.memory_space<vmem>>, vector<512x256xf32>
    %1 = arith.truncf %0 : vector<512x256xf32> to vector<512x256xbf16>
    %c0_1 = arith.constant 0 : index
    %c0_2 = arith.constant 0 : index
    %2 = vector.load %arg2[%c0_1, %c0_2] : memref<256x128xbf16, #tpu.memory_space<vmem>>, vector<256x128xbf16>
    %cst = arith.constant dense<0.000000e+00> : vector<512x128xf32>
    %3 = tpu.matmul %1, %2, %cst {dimension_numbers = #tpu.dot_dimension_numbers<[1], [0], [0], [1], [0, 0, 1, 1], [], []>} : vector<512x256xbf16>, vector<256x128xbf16>, vector<512x128xf32> -> vector<512x128xf32>
    %c0_3 = arith.constant 0 : index
    %c0_4 = arith.constant 0 : index
    %4 = vector.load %arg3[%c0_3, %c0_4] : memref<1x128xf32, #tpu.memory_space<vmem>>, vector<1x128xf32>
    %5 = vector.broadcast %4 : vector<1x128xf32> to vector<512x128xf32>
    %6 = arith.addf %3, %5 : vector<512x128xf32>
    %c0_5 = arith.constant 0 : index
    %c0_6 = arith.constant 0 : index
    %7 = vector.load %arg4[%c0_5, %c0_6] : memref<512x128xf32, #tpu.memory_space<vmem>>, vector<512x128xf32>
    tpu.vector_store %arg4[%c0_5, %c0_6], %6 {strides = array<i32>} : memref<512x128xf32, #tpu.memory_space<vmem>>, vector<512x128xf32>,
    return
  }
  func.func @transform_0(%arg0: i32) -> (i32, i32) {
    %c0_i32 = arith.constant 0 : i32
    %c0_i32_0 = arith.constant 0 : i32
    return %arg0, %c0_i32 : i32, i32
  }
  func.func @transform_1(%arg0: i32) -> (i32, i32) {
    %c0_i32 = arith.constant 0 : i32
    %c0_i32_0 = arith.constant 0 : i32
    %c0_i32_1 = arith.constant 0 : i32
    return %c0_i32, %c0_i32_0 : i32, i32
  }
  func.func @transform_2(%arg0: i32) -> (i32, i32) {
    %c0_i32 = arith.constant 0 : i32
    %c0_i32_0 = arith.constant 0 : i32
    %c0_i32_1 = arith.constant 0 : i32
    return %c0_i32, %c0_i32_0 : i32, i32
  }
  func.func @transform_3(%arg0: i32) -> (i32, i32) {
    %c0_i32 = arith.constant 0 : i32
    %c0_i32_0 = arith.constant 0 : i32
    return %arg0, %c0_i32 : i32, i32
  }
}

</mosaic_0001>

<llo_original>
// kernel: tpu_custom_call.1
$region0: #{tpu_custom_call.1}
  #allocation0 [shape = 'u32[]', space=smem, size = 0x4, offset = 0x4, fixed_abs, tag = 'smem constant byte address 0x4 - core index']
  #allocation1 [shape = 'u32[72,128]{1,0:T(1,128)}', space=vmem, size = 0x9000, scoped, tag = 'internal scratch']
  %s0 = inlined_call_operand.hbm [shape: f32[512,256], index: 0, kind: input, shape index: {}]
  %s1 = inlined_call_operand.hbm [shape: bf16[256,128], index: 1, kind: input, shape index: {}]
  %s2 = inlined_call_operand.vmem [shape: f32[1,128], index: 2, kind: input, shape index: {}]
  %s3 = inlined_call_operand.hbm [shape: f32[512,128], index: 3, kind: output, shape index: {}]
  %s4 = sld [smem:[#allocation0]]
  $region30: #{tpu_custom_call.1} parent=0
    _
  %s6 = ssub.s32 1, %s4
  %s7 = scalar_select 0, %s6, %s4
  $region1: #{tpu_custom_call.1} parent=0
    #allocation2 [shape = 'u8[524288]{0}', space=vmem, size = 0x80000, scoped, tag = 'input window, operand 0, single buffered']
    #allocation3 [shape = 's32[1]{0}', space=sflag, size = 0x4, scoped, tag = 'scoped memory for tpu_custom_call.1']
    #allocation4 [shape = 's32[1]{0}', space=sflag, size = 0x4, scoped, tag = 'scoped memory for tpu_custom_call.1']
    #allocation5 [shape = 'u8[65536]{0}', space=vmem, size = 0x10000, scoped, tag = 'input window, operand 1, single buffered']
    #allocation6 [shape = 's32[1]{0}', space=sflag, size = 0x4, scoped, tag = 'scoped memory for tpu_custom_call.1']
    #allocation7 [shape = 'u8[262144]{0}', space=vmem, size = 0x40000, scoped, tag = 'output window, operand 0, single buffered']
    %8 = vsyncpa [#allocation3], 0
    %9 = vsyncpa [#allocation6], 0
    %10 = vsyncpa [#allocation4], 0
    // Predicated region
    $region2: #{tpu_custom_call.1} parent=1 // pred_check
      _
    $region3: #{tpu_custom_call.1} parent=1 // pred_check_branch
      %12 = sbr.rel (0) target = $region5
    $region4: #{tpu_custom_call.1} parent=1 // pred_region
      %14 = vsyncadd [#allocation3], 0
      %s15 = sshll.u32 %s0, 4
      %s16 = int_to_ptr.hbm [resolvable:$true] %s15
      %s17 = sshll.u32 [#allocation2], 4
      %s18 = int_to_ptr.vmem [resolvable:$true] %s17
      %23 = dma.hbm_to_vmem [thread:$0]  %s16, 16384, %s18, [#allocation3], 256, 256, 16
    $region5: #{tpu_custom_call.1} parent=1 // pred_fallthru
      _
    // Predicated region
    $region6: #{tpu_custom_call.1} parent=1 // pred_check
      _
    $region7: #{tpu_custom_call.1} parent=1 // pred_check_branch
      %25 = sbr.rel (0) target = $region9
    $region8: #{tpu_custom_call.1} parent=1 // pred_region
      %27 = vsyncadd [#allocation6], 0
      %s28 = sshll.u32 %s1, 4
      %s29 = int_to_ptr.hbm [resolvable:$true] %s28
      %s30 = sshll.u32 [#allocation5], 4
      %s31 = int_to_ptr.vmem [resolvable:$true] %s30
      %36 = dma.hbm_to_vmem [thread:$0]  %s29, 2048, %s31, [#allocation6], 64, 64, 4
    $region9: #{tpu_custom_call.1} parent=1 // pred_fallthru
      _
    // Predicated region
    $region10: #{tpu_custom_call.1} parent=1 // pred_check
      _
    $region11: #{tpu_custom_call.1} parent=1 // pred_check_branch
      %38 = sbr.rel (0) target = $region13
    $region12: #{tpu_custom_call.1} parent=1 // pred_region
      _
    $region13: #{tpu_custom_call.1} parent=1 // pred_fallthru
      _
    // Predicated region
    $region14: #{tpu_custom_call.1} parent=1 // pred_check
      _
    $region15: #{tpu_custom_call.1} parent=1 // pred_check_branch
      %40 = sbr.rel (0) target = $region17
    $region16: #{tpu_custom_call.1} parent=1 // pred_region
      %42 = dma.done [#allocation3], 16384
    $region17: #{tpu_custom_call.1} parent=1 // pred_fallthru
      _
    // Predicated region
    $region18: #{tpu_custom_call.1} parent=1 // pred_check
      _
    $region19: #{tpu_custom_call.1} parent=1 // pred_check_branch
      %44 = sbr.rel (0) target = $region21
    $region20: #{tpu_custom_call.1} parent=1 // pred_region
      %46 = dma.done [#allocation6], 2048
    $region21: #{tpu_custom_call.1} parent=1 // pred_fallthru
      _
    %v47 = vld [vmem:[#allocation2] sm:$0xff]
    %v48 = vld [vmem:[#allocation2 + $0x8] sm:$0xff]
    %v49 = vld [vmem:[#allocation2 + $0x10] sm:$0xff]
    %v50 = vld [vmem:[#allocation2 + $0x18] sm:$0xff]
    %v51 = vld [vmem:[#allocation2 + $0x20] sm:$0xff]
    %v52 = vld [vmem:[#allocation2 + $0x28] sm:$0xff]
    %v53 = vld [vmem:[#allocation2 + $0x30] sm:$0xff]
    %v54 = vld [vmem:[#allocation2 + $0x38] sm:$0xff]
    %v55 = vld [vmem:[#allocation2 + $0x40] sm:$0xff]
    %v56 = vld [vmem:[#allocation2 + $0x48] sm:$0xff]
    %v57 = vld [vmem:[#allocation2 + $0x50] sm:$0xff]
    %v58 = vld [vmem:[#allocation2 + $0x58] sm:$0xff]
    %v59 = vld [vmem:[#allocation2 + $0x60] sm:$0xff]
    %v60 = vld [vmem:[#allocation2 + $0x68] sm:$0xff]
    %v61 = vld [vmem:[#allocation2 + $0x70] sm:$0xff]
    %v62 = vld [vmem:[#allocation2 + $0x78] sm:$0xff]
    %v63 = vld [vmem:[#allocation2 + $0x80] sm:$0xff]
    %v64 = vld [vmem:[#allocation2 + $0x88] sm:$0xff]
    %v65 = vld [vmem:[#allocation2 + $0x90] sm:$0xff]
    %v66 = vld [vmem:[#allocation2 + $0x98] sm:$0xff]
    %v67 = vld [vmem:[#allocation2 + $0xa0] sm:$0xff]
    %v68 = vld [vmem:[#allocation2 + $0xa8] sm:$0xff]
    %v69 = vld [vmem:[#allocation2 + $0xb0] sm:$0xff]
    %v70 = vld [vmem:[#allocation2 + $0xb8] sm:$0xff]
    %v71 = vld [vmem:[#allocation2 + $0xc0] sm:$0xff]
    %v72 = vld [vmem:[#allocation2 + $0xc8] sm:$0xff]
    %v73 = vld [vmem:[#allocation2 + $0xd0] sm:$0xff]
    %v74 = vld [vmem:[#allocation2 + $0xd8] sm:$0xff]
    %v75 = vld [vmem:[#allocation2 + $0xe0] sm:$0xff]
    %v76 = vld [vmem:[#allocation2 + $0xe8] sm:$0xff]
    %v77 = vld [vmem:[#allocation2 + $0xf0] sm:$0xff]
    %v78 = vld [vmem:[#allocation2 + $0xf8] sm:$0xff]
    %v79 = vld [vmem:[#allocation2 + $0x100] sm:$0xff]
    %v80 = vld [vmem:[#allocation2 + $0x108] sm:$0xff]
    %v81 = vld [vmem:[#allocation2 + $0x110] sm:$0xff]
    %v82 = vld [vmem:[#allocation2 + $0x118] sm:$0xff]
    %v83 = vld [vmem:[#allocation2 + $0x120] sm:$0xff]
    %v84 = vld [vmem:[#allocation2 + $0x128] sm:$0xff]
    %v85 = vld [vmem:[#allocation2 + $0x130] sm:$0xff]
    %v86 = vld [vmem:[#allocation2 + $0x138] sm:$0xff]
    %v87 = vld [vmem:[#allocation2 + $0x140] sm:$0xff]
    %v88 = vld [vmem:[#allocation2 + $0x148] sm:$0xff]
    %v89 = vld [vmem:[#allocation2 + $0x150] sm:$0xff]
    %v90 = vld [vmem:[#allocation2 + $0x158] sm:$0xff]
    %v91 = vld [vmem:[#allocation2 + $0x160] sm:$0xff]
    %v92 = vld [vmem:[#allocation2 + $0x168] sm:$0xff]
    %v93 = vld [vmem:[#allocation2 + $0x170] sm:$0xff]
    %v94 = vld [vmem:[#allocation2 + $0x178] sm:$0xff]
    %v95 = vld [vmem:[#allocation2 + $0x180] sm:$0xff]
    %v96 = vld [vmem:[#allocation2 + $0x188] sm:$0xff]
    %v97 = vld [vmem:[#allocation2 + $0x190] sm:$0xff]
    %v98 = vld [vmem:[#allocation2 + $0x198] sm:$0xff]
    %v99 = vld [vmem:[#allocation2 + $0x1a0] sm:$0xff]
    %v100 = vld [vmem:[#allocation2 + $0x1a8] sm:$0xff]
    %v101 = vld [vmem:[#allocation2 + $0x1b0] sm:$0xff]
    %v102 = vld [vmem:[#allocation2 + $0x1b8] sm:$0xff]
    %v103 = vld [vmem:[#allocation2 + $0x1c0] sm:$0xff]
    %v104 = vld [vmem:[#allocation2 + $0x1c8] sm:$0xff]
    %v105 = vld [vmem:[#allocation2 + $0x1d0] sm:$0xff]
    %v106 = vld [vmem:[#allocation2 + $0x1d8] sm:$0xff]
    %v107 = vld [vmem:[#allocation2 + $0x1e0] sm:$0xff]
    %v108 = vld [vmem:[#allocation2 + $0x1e8] sm:$0xff]
    %v109 = vld [vmem:[#allocation2 + $0x1f0] sm:$0xff]
    %v110 = vld [vmem:[#allocation2 + $0x1f8] sm:$0xff]
    %v111 = vld [vmem:[#allocation2 + $0x200] sm:$0xff]
    %v112 = vld [vmem:[#allocation2 + $0x208] sm:$0xff]
    %v113 = vld [vmem:[#allocation2 + $0x210] sm:$0xff]
    %v114 = vld [vmem:[#allocation2 + $0x218] sm:$0xff]
    %v115 = vld [vmem:[#allocation2 + $0x220] sm:$0xff]
    %v116 = vld [vmem:[#allocation2 + $0x228] sm:$0xff]
    %v117 = vld [vmem:[#allocation2 + $0x230] sm:$0xff]
    %v118 = vld [vmem:[#allocation2 + $0x238] sm:$0xff]
    %v119 = vld [vmem:[#allocation2 + $0x240] sm:$0xff]
    %v120 = vld [vmem:[#allocation2 + $0x248] sm:$0xff]
    %v121 = vld [vmem:[#allocation2 + $0x250] sm:$0xff]
    %v122 = vld [vmem:[#allocation2 + $0x258] sm:$0xff]
    %v123 = vld [vmem:[#allocation2 + $0x260] sm:$0xff]
    %v124 = vld [vmem:[#allocation2 + $0x268] sm:$0xff]
    %v125 = vld [vmem:[#allocation2 + $0x270] sm:$0xff]
    %v126 = vld [vmem:[#allocation2 + $0x278] sm:$0xff]
    %v127 = vld [vmem:[#allocation2 + $0x280] sm:$0xff]
    %v128 = vld [vmem:[#allocation2 + $0x288] sm:$0xff]
    %v129 = vld [vmem:[#allocation2 + $0x290] sm:$0xff]
    %v130 = vld [vmem:[#allocation2 + $0x298] sm:$0xff]
    %v131 = vld [vmem:[#allocation2 + $0x2a0] sm:$0xff]
    %v132 = vld [vmem:[#allocation2 + $0x2a8] sm:$0xff]
    %v133 = vld [vmem:[#allocation2 + $0x2b0] sm:$0xff]
    %v134 = vld [vmem:[#allocation2 + $0x2b8] sm:$0xff]
    %v135 = vld [vmem:[#allocation2 + $0x2c0] sm:$0xff]
    %v136 = vld [vmem:[#allocation2 + $0x2c8] sm:$0xff]
    %v137 = vld [vmem:[#allocation2 + $0x2d0] sm:$0xff]
    %v138 = vld [vmem:[#allocation2 + $0x2d8] sm:$0xff]
    %v139 = vld [vmem:[#allocation2 + $0x2e0] sm:$0xff]
    %v140 = vld [vmem:[#allocation2 + $0x2e8] sm:$0xff]
    %v141 = vld [vmem:[#allocation2 + $0x2f0] sm:$0xff]
    %v142 = vld [vmem:[#allocation2 + $0x2f8] sm:$0xff]
    %v143 = vld [vmem:[#allocation2 + $0x300] sm:$0xff]
    %v144 = vld [vmem:[#allocation2 + $0x308] sm:$0xff]
    %v145 = vld [vmem:[#allocation2 + $0x310] sm:$0xff]
    %v146 = vld [vmem:[#allocation2 + $0x318] sm:$0xff]
    %v147 = vld [vmem:[#allocation2 + $0x320] sm:$0xff]
    %v148 = vld [vmem:[#allocation2 + $0x328] sm:$0xff]
    %v149 = vld [vmem:[#allocation2 + $0x330] sm:$0xff]
    %v150 = vld [vmem:[#allocation2 + $0x338] sm:$0xff]
    %v151 = vld [vmem:[#allocation2 + $0x340] sm:$0xff]
    %v152 = vld [vmem:[#allocation2 + $0x348] sm:$0xff]
    %v153 = vld [vmem:[#allocation2 + $0x350] sm:$0xff]
    %v154 = vld [vmem:[#allocation2 + $0x358] sm:$0xff]
    %v155 = vld [vmem:[#allocation2 + $0x360] sm:$0xff]
    %v156 = vld [vmem:[#allocation2 + $0x368] sm:$0xff]
    %v157 = vld [vmem:[#allocation2 + $0x370] sm:$0xff]
    %v158 = vld [vmem:[#allocation2 + $0x378] sm:$0xff]
    %v159 = vld [vmem:[#allocation2 + $0x380] sm:$0xff]
    %v160 = vld [vmem:[#allocation2 + $0x388] sm:$0xff]
    %v161 = vld [vmem:[#allocation2 + $0x390] sm:$0xff]
    %v162 = vld [vmem:[#allocation2 + $0x398] sm:$0xff]
    %v163 = vld [vmem:[#allocation2 + $0x3a0] sm:$0xff]
    %v164 = vld [vmem:[#allocation2 + $0x3a8] sm:$0xff]
    %v165 = vld [vmem:[#allocation2 + $0x3b0] sm:$0xff]
    %v166 = vld [vmem:[#allocation2 + $0x3b8] sm:$0xff]
    %v167 = vld [vmem:[#allocation2 + $0x3c0] sm:$0xff]
    %v168 = vld [vmem:[#allocation2 + $0x3c8] sm:$0xff]
    %v169 = vld [vmem:[#allocation2 + $0x3d0] sm:$0xff]
    %v170 = vld [vmem:[#allocation2 + $0x3d8] sm:$0xff]
    %v171 = vld [vmem:[#allocation2 + $0x3e0] sm:$0xff]
    %v172 = vld [vmem:[#allocation2 + $0x3e8] sm:$0xff]
    %v173 = vld [vmem:[#allocation2 + $0x3f0] sm:$0xff]
    %v174 = vld [vmem:[#allocation2 + $0x3f8] sm:$0xff]
    %v175 = vpack.c.bf16 %v49, %v47
    %v176 = vpack.c.bf16 %v50, %v48
    %v177 = vpack.c.bf16 %v53, %v51
    %v178 = vpack.c.bf16 %v54, %v52
    %v179 = vpack.c.bf16 %v57, %v55
    %v180 = vpack.c.bf16 %v58, %v56
    %v181 = vpack.c.bf16 %v61, %v59
    %v182 = vpack.c.bf16 %v62, %v60
    %v183 = vpack.c.bf16 %v65, %v63
    %v184 = vpack.c.bf16 %v66, %v64
    %v185 = vpack.c.bf16 %v69, %v67
    %v186 = vpack.c.bf16 %v70, %v68
    %v187 = vpack.c.bf16 %v73, %v71
    %v188 = vpack.c.bf16 %v74, %v72
    %v189 = vpack.c.bf16 %v77, %v75
    %v190 = vpack.c.bf16 %v78, %v76
    %v191 = vpack.c.bf16 %v81, %v79
    %v192 = vpack.c.bf16 %v82, %v80
    %v193 = vpack.c.bf16 %v85, %v83
    %v194 = vpack.c.bf16 %v86, %v84
    %v195 = vpack.c.bf16 %v89, %v87
    %v196 = vpack.c.bf16 %v90, %v88
    %v197 = vpack.c.bf16 %v93, %v91
    %v198 = vpack.c.bf16 %v94, %v92
    %v199 = vpack.c.bf16 %v97, %v95
    %v200 = vpack.c.bf16 %v98, %v96
    %v201 = vpack.c.bf16 %v101, %v99
    %v202 = vpack.c.bf16 %v102, %v100
    %v203 = vpack.c.bf16 %v105, %v103
    %v204 = vpack.c.bf16 %v106, %v104
    %v205 = vpack.c.bf16 %v109, %v107
    %v206 = vpack.c.bf16 %v110, %v108
    %v207 = vpack.c.bf16 %v113, %v111
    %v208 = vpack.c.bf16 %v114, %v112
    %v209 = vpack.c.bf16 %v117, %v115
    %v210 = vpack.c.bf16 %v118, %v116
    %v211 = vpack.c.bf16 %v121, %v119
    %v212 = vpack.c.bf16 %v122, %v120
    %v213 = vpack.c.bf16 %v125, %v123
    %v214 = vpack.c.bf16 %v126, %v124
    %v215 = vpack.c.bf16 %v129, %v127
    %v216 = vpack.c.bf16 %v130, %v128
    %v217 = vpack.c.bf16 %v133, %v131
    %v218 = vpack.c.bf16 %v134, %v132
    %v219 = vpack.c.bf16 %v137, %v135
    %v220 = vpack.c.bf16 %v138, %v136
    %v221 = vpack.c.bf16 %v141, %v139
    %v222 = vpack.c.bf16 %v142, %v140
    %v223 = vpack.c.bf16 %v145, %v143
    %v224 = vpack.c.bf16 %v146, %v144
    %v225 = vpack.c.bf16 %v149, %v147
    %v226 = vpack.c.bf16 %v150, %v148
    %v227 = vpack.c.bf16 %v153, %v151
    %v228 = vpack.c.bf16 %v154, %v152
    %v229 = vpack.c.bf16 %v157, %v155
    %v230 = vpack.c.bf16 %v158, %v156
    %v231 = vpack.c.bf16 %v161, %v159
    %v232 = vpack.c.bf16 %v162, %v160
    %v233 = vpack.c.bf16 %v165, %v163
    %v234 = vpack.c.bf16 %v166, %v164
    %v235 = vpack.c.bf16 %v169, %v167
    %v236 = vpack.c.bf16 %v170, %v168
    %v237 = vpack.c.bf16 %v173, %v171
    %v238 = vpack.c.bf16 %v174, %v172
    %v239 = vld [vmem:[#allocation5] sm:$0xf]
    %v240 = vld [vmem:[#allocation5 + $0x4] sm:$0xf]
    %v241 = vld [vmem:[#allocation5 + $0x8] sm:$0xf]
    %v242 = vld [vmem:[#allocation5 + $0xc] sm:$0xf]
    %v243 = vld [vmem:[#allocation5 + $0x10] sm:$0xf]
    %v244 = vld [vmem:[#allocation5 + $0x14] sm:$0xf]
    %v245 = vld [vmem:[#allocation5 + $0x18] sm:$0xf]
    %v246 = vld [vmem:[#allocation5 + $0x1c] sm:$0xf]
    %v247 = vld [vmem:[#allocation5 + $0x20] sm:$0xf]
    %v248 = vld [vmem:[#allocation5 + $0x24] sm:$0xf]
    %v249 = vld [vmem:[#allocation5 + $0x28] sm:$0xf]
    %v250 = vld [vmem:[#allocation5 + $0x2c] sm:$0xf]
    %v251 = vld [vmem:[#allocation5 + $0x30] sm:$0xf]
    %v252 = vld [vmem:[#allocation5 + $0x34] sm:$0xf]
    %v253 = vld [vmem:[#allocation5 + $0x38] sm:$0xf]
    %v254 = vld [vmem:[#allocation5 + $0x3c] sm:$0xf]
    %v255 = vld [vmem:[#allocation5 + $0x40] sm:$0xf]
    %v256 = vld [vmem:[#allocation5 + $0x44] sm:$0xf]
    %v257 = vld [vmem:[#allocation5 + $0x48] sm:$0xf]
    %v258 = vld [vmem:[#allocation5 + $0x4c] sm:$0xf]
    %v259 = vld [vmem:[#allocation5 + $0x50] sm:$0xf]
    %v260 = vld [vmem:[#allocation5 + $0x54] sm:$0xf]
    %v261 = vld [vmem:[#allocation5 + $0x58] sm:$0xf]
    %v262 = vld [vmem:[#allocation5 + $0x5c] sm:$0xf]
    %v263 = vld [vmem:[#allocation5 + $0x60] sm:$0xf]
    %v264 = vld [vmem:[#allocation5 + $0x64] sm:$0xf]
    %v265 = vld [vmem:[#allocation5 + $0x68] sm:$0xf]
    %v266 = vld [vmem:[#allocation5 + $0x6c] sm:$0xf]
    %v267 = vld [vmem:[#allocation5 + $0x70] sm:$0xf]
    %v268 = vld [vmem:[#allocation5 + $0x74] sm:$0xf]
    %v269 = vld [vmem:[#allocation5 + $0x78] sm:$0xf]
    %v270 = vld [vmem:[#allocation5 + $0x7c] sm:$0xf]
    %v271 = vld [vmem:[%s2] sm:$0x1]
    %v273 = vperm.slane %v271, 0
    %v307 = vunpack.c.l.b16 %v239
    %v308 = vunpack.c.l.b16 %v240
    %v309 = vunpack.c.l.b16 %v241
    %v310 = vunpack.c.l.b16 %v242
    %v311 = vunpack.c.l.b16 %v243
    %v312 = vunpack.c.l.b16 %v244
    %v313 = vunpack.c.l.b16 %v245
    %v314 = vunpack.c.l.b16 %v246
    %v315 = vunpack.c.l.b16 %v247
    %v316 = vunpack.c.l.b16 %v248
    %v317 = vunpack.c.l.b16 %v249
    %v318 = vunpack.c.l.b16 %v250
    %v319 = vunpack.c.l.b16 %v251
    %v320 = vunpack.c.l.b16 %v252
    %v321 = vunpack.c.l.b16 %v253
    %v322 = vunpack.c.l.b16 %v254
    %v323 = vunpack.c.l.b16 %v255
    %v324 = vunpack.c.l.b16 %v256
    %v325 = vunpack.c.l.b16 %v257
    %v326 = vunpack.c.l.b16 %v258
    %v327 = vunpack.c.l.b16 %v259
    %v328 = vunpack.c.l.b16 %v260
    %v329 = vunpack.c.l.b16 %v261
    %v330 = vunpack.c.l.b16 %v262
    %v331 = vunpack.c.l.b16 %v263
    %v332 = vunpack.c.l.b16 %v264
    %v333 = vunpack.c.l.b16 %v265
    %v334 = vunpack.c.l.b16 %v266
    %v335 = vunpack.c.l.b16 %v267
    %v336 = vunpack.c.l.b16 %v268
    %v337 = vunpack.c.l.b16 %v269
    %v338 = vunpack.c.l.b16 %v270
    %v339 = vpack.c.b16 %v308, %v307
    %v340 = vpack.c.b16 %v310, %v309
    %v341 = vpack.c.b16 %v312, %v311
    %v342 = vpack.c.b16 %v314, %v313
    %v343 = vpack.c.b16 %v316, %v315
    %v344 = vpack.c.b16 %v318, %v317
    %v345 = vpack.c.b16 %v320, %v319
    %v346 = vpack.c.b16 %v322, %v321
    %v347 = vpack.c.b16 %v324, %v323
    %v348 = vpack.c.b16 %v326, %v325
    %v349 = vpack.c.b16 %v328, %v327
    %v350 = vpack.c.b16 %v330, %v329
    %v351 = vpack.c.b16 %v332, %v331
    %v352 = vpack.c.b16 %v334, %v333
    %v353 = vpack.c.b16 %v336, %v335
    %v354 = vpack.c.b16 %v338, %v337
    %371 = vmatpush.bf16.msra.mxu0 %v346
    %372 = vmatpush.bf16.msra.mxu0 %v345
    %373 = vmatpush.bf16.msra.mxu0 %v344
    %374 = vmatpush.bf16.msra.mxu0 %v343
    %375 = vmatpush.bf16.msra.mxu0 %v342
    %376 = vmatpush.bf16.msra.mxu0 %v341
    %377 = vmatpush.bf16.msra.mxu0 %v340
    %378 = vmatpush.bf16.msra.mxu0 %v339
    %379 = vmatmul.bf16.gmra.mxu0 %v175
    %v380 = vpop.f32.mrf.mxu0
    %v381 = vadd.f32 %v273, %v380
    %v382 = vpop.f32.mrf.mxu0
    %v383 = vadd.f32 %v273, %v382
    %384 = vmatmul.bf16.gmra.mxu0 %v177
    %v385 = vpop.f32.mrf.mxu0
    %v386 = vadd.f32 %v273, %v385
    %v387 = vpop.f32.mrf.mxu0
    %v388 = vadd.f32 %v273, %v387
    %389 = vmatmul.bf16.gmra.mxu0 %v179
    %v390 = vpop.f32.mrf.mxu0
    %v391 = vadd.f32 %v273, %v390
    %v392 = vpop.f32.mrf.mxu0
    %v393 = vadd.f32 %v273, %v392
    %394 = vmatmul.bf16.gmra.mxu0 %v181
    %v395 = vpop.f32.mrf.mxu0
    %v396 = vadd.f32 %v273, %v395
    %v397 = vpop.f32.mrf.mxu0
    %v398 = vadd.f32 %v273, %v397
    %399 = vmatmul.bf16.gmra.mxu0 %v183
    %v400 = vpop.f32.mrf.mxu0
    %v401 = vadd.f32 %v273, %v400
    %v402 = vpop.f32.mrf.mxu0
    %v403 = vadd.f32 %v273, %v402
    %404 = vmatmul.bf16.gmra.mxu0 %v185
    %v405 = vpop.f32.mrf.mxu0
    %v406 = vadd.f32 %v273, %v405
    %v407 = vpop.f32.mrf.mxu0
    %v408 = vadd.f32 %v273, %v407
    %409 = vmatmul.bf16.gmra.mxu0 %v187
    %v410 = vpop.f32.mrf.mxu0
    %v411 = vadd.f32 %v273, %v410
    %v412 = vpop.f32.mrf.mxu0
    %v413 = vadd.f32 %v273, %v412
    %414 = vmatmul.bf16.gmra.mxu0 %v189
    %v415 = vpop.f32.mrf.mxu0
    %v416 = vadd.f32 %v273, %v415
    %v417 = vpop.f32.mrf.mxu0
    %v418 = vadd.f32 %v273, %v417
    %419 = vmatmul.bf16.gmra.mxu0 %v191
    %v420 = vpop.f32.mrf.mxu0
    %v421 = vadd.f32 %v273, %v420
    %v422 = vpop.f32.mrf.mxu0
    %v423 = vadd.f32 %v273, %v422
    %424 = vmatmul.bf16.gmra.mxu0 %v193
    %v425 = vpop.f32.mrf.mxu0
    %v426 = vadd.f32 %v273, %v425
    %v427 = vpop.f32.mrf.mxu0
    %v428 = vadd.f32 %v273, %v427
    %429 = vmatmul.bf16.gmra.mxu0 %v195
    %v430 = vpop.f32.mrf.mxu0
    %v431 = vadd.f32 %v273, %v430
    %v432 = vpop.f32.mrf.mxu0
    %v433 = vadd.f32 %v273, %v432
    %434 = vmatmul.bf16.gmra.mxu0 %v197
    %v435 = vpop.f32.mrf.mxu0
    %v436 = vadd.f32 %v273, %v435
    %v437 = vpop.f32.mrf.mxu0
    %v438 = vadd.f32 %v273, %v437
    %439 = vmatmul.bf16.gmra.mxu0 %v199
    %v440 = vpop.f32.mrf.mxu0
    %v441 = vadd.f32 %v273, %v440
    %v442 = vpop.f32.mrf.mxu0
    %v443 = vadd.f32 %v273, %v442
    %444 = vmatmul.bf16.gmra.mxu0 %v201
    %v445 = vpop.f32.mrf.mxu0
    %v446 = vadd.f32 %v273, %v445
    %v447 = vpop.f32.mrf.mxu0
    %v448 = vadd.f32 %v273, %v447
    %449 = vmatmul.bf16.gmra.mxu0 %v203
    %v450 = vpop.f32.mrf.mxu0
    %v451 = vadd.f32 %v273, %v450
    %v452 = vpop.f32.mrf.mxu0
    %v453 = vadd.f32 %v273, %v452
    %454 = vmatmul.bf16.gmra.mxu0 %v205
    %v455 = vpop.f32.mrf.mxu0
    %v456 = vadd.f32 %v273, %v455
    %v457 = vpop.f32.mrf.mxu0
    %v458 = vadd.f32 %v273, %v457
    %459 = vmatmul.bf16.gmra.mxu0 %v207
    %v460 = vpop.f32.mrf.mxu0
    %v461 = vadd.f32 %v273, %v460
    %v462 = vpop.f32.mrf.mxu0
    %v463 = vadd.f32 %v273, %v462
    %464 = vmatmul.bf16.gmra.mxu0 %v209
    %v465 = vpop.f32.mrf.mxu0
    %v466 = vadd.f32 %v273, %v465
    %v467 = vpop.f32.mrf.mxu0
    %v468 = vadd.f32 %v273, %v467
    %469 = vmatmul.bf16.gmra.mxu0 %v211
    %v470 = vpop.f32.mrf.mxu0
    %v471 = vadd.f32 %v273, %v470
    %v472 = vpop.f32.mrf.mxu0
    %v473 = vadd.f32 %v273, %v472
    %474 = vmatmul.bf16.gmra.mxu0 %v213
    %v475 = vpop.f32.mrf.mxu0
    %v476 = vadd.f32 %v273, %v475
    %v477 = vpop.f32.mrf.mxu0
    %v478 = vadd.f32 %v273, %v477
    %479 = vmatmul.bf16.gmra.mxu0 %v215
    %v480 = vpop.f32.mrf.mxu0
    %v481 = vadd.f32 %v273, %v480
    %v482 = vpop.f32.mrf.mxu0
    %v483 = vadd.f32 %v273, %v482
    %484 = vmatmul.bf16.gmra.mxu0 %v217
    %v485 = vpop.f32.mrf.mxu0
    %v486 = vadd.f32 %v273, %v485
    %v487 = vpop.f32.mrf.mxu0
    %v488 = vadd.f32 %v273, %v487
    %489 = vmatmul.bf16.gmra.mxu0 %v219
    %v490 = vpop.f32.mrf.mxu0
    %v491 = vadd.f32 %v273, %v490
    %v492 = vpop.f32.mrf.mxu0
    %v493 = vadd.f32 %v273, %v492
    %494 = vmatmul.bf16.gmra.mxu0 %v221
    %v495 = vpop.f32.mrf.mxu0
    %v496 = vadd.f32 %v273, %v495
    %v497 = vpop.f32.mrf.mxu0
    %v498 = vadd.f32 %v273, %v497
    %499 = vmatmul.bf16.gmra.mxu0 %v223
    %v500 = vpop.f32.mrf.mxu0
    %v501 = vadd.f32 %v273, %v500
    %v502 = vpop.f32.mrf.mxu0
    %v503 = vadd.f32 %v273, %v502
    %504 = vmatmul.bf16.gmra.mxu0 %v225
    %v505 = vpop.f32.mrf.mxu0
    %v506 = vadd.f32 %v273, %v505
    %v507 = vpop.f32.mrf.mxu0
    %v508 = vadd.f32 %v273, %v507
    %509 = vmatmul.bf16.gmra.mxu0 %v227
    %v510 = vpop.f32.mrf.mxu0
    %v511 = vadd.f32 %v273, %v510
    %v512 = vpop.f32.mrf.mxu0
    %v513 = vadd.f32 %v273, %v512
    %514 = vmatmul.bf16.gmra.mxu0 %v229
    %v515 = vpop.f32.mrf.mxu0
    %v516 = vadd.f32 %v273, %v515
    %v517 = vpop.f32.mrf.mxu0
    %v518 = vadd.f32 %v273, %v517
    %519 = vmatmul.bf16.gmra.mxu0 %v231
    %v520 = vpop.f32.mrf.mxu0
    %v521 = vadd.f32 %v273, %v520
    %v522 = vpop.f32.mrf.mxu0
    %v523 = vadd.f32 %v273, %v522
    %524 = vmatmul.bf16.gmra.mxu0 %v233
    %v525 = vpop.f32.mrf.mxu0
    %v526 = vadd.f32 %v273, %v525
    %v527 = vpop.f32.mrf.mxu0
    %v528 = vadd.f32 %v273, %v527
    %529 = vmatmul.bf16.gmra.mxu0 %v235
    %v530 = vpop.f32.mrf.mxu0
    %v531 = vadd.f32 %v273, %v530
    %v532 = vpop.f32.mrf.mxu0
    %v533 = vadd.f32 %v273, %v532
    %534 = vmatmul.bf16.gmra.mxu0 %v237
    %v535 = vpop.f32.mrf.mxu0
    %v536 = vadd.f32 %v273, %v535
    %v537 = vpop.f32.mrf.mxu0
    %v538 = vadd.f32 %v273, %v537
    %539 = vdwg.mxu0
    %540 = vmatpush.bf16.msra.mxu0 %v354
    %541 = vmatpush.bf16.msra.mxu0 %v353
    %542 = vmatpush.bf16.msra.mxu0 %v352
    %543 = vmatpush.bf16.msra.mxu0 %v351
    %544 = vmatpush.bf16.msra.mxu0 %v350
    %545 = vmatpush.bf16.msra.mxu0 %v349
    %546 = vmatpush.bf16.msra.mxu0 %v348
    %547 = vmatpush.bf16.msra.mxu0 %v347
    %548 = vmatmul.bf16.gmra.mxu0 %v176
    %v549 = vpop.f32.mrf.mxu0
    %v550 = vadd.f32 %v381, %v549
    %v551 = vpop.f32.mrf.mxu0
    %v552 = vadd.f32 %v383, %v551
    %553 = vmatmul.bf16.gmra.mxu0 %v178
    %v554 = vpop.f32.mrf.mxu0
    %v555 = vadd.f32 %v386, %v554
    %v556 = vpop.f32.mrf.mxu0
    %v557 = vadd.f32 %v388, %v556
    %558 = vmatmul.bf16.gmra.mxu0 %v180
    %v559 = vpop.f32.mrf.mxu0
    %v560 = vadd.f32 %v391, %v559
    %v561 = vpop.f32.mrf.mxu0
    %v562 = vadd.f32 %v393, %v561
    %563 = vmatmul.bf16.gmra.mxu0 %v182
    %v564 = vpop.f32.mrf.mxu0
    %v565 = vadd.f32 %v396, %v564
    %v566 = vpop.f32.mrf.mxu0
    %v567 = vadd.f32 %v398, %v566
    %568 = vmatmul.bf16.gmra.mxu0 %v184
    %v569 = vpop.f32.mrf.mxu0
    %v570 = vadd.f32 %v401, %v569
    %v571 = vpop.f32.mrf.mxu0
    %v572 = vadd.f32 %v403, %v571
    %573 = vmatmul.bf16.gmra.mxu0 %v186
    %v574 = vpop.f32.mrf.mxu0
    %v575 = vadd.f32 %v406, %v574
    %v576 = vpop.f32.mrf.mxu0
    %v577 = vadd.f32 %v408, %v576
    %578 = vmatmul.bf16.gmra.mxu0 %v188
    %v579 = vpop.f32.mrf.mxu0
    %v580 = vadd.f32 %v411, %v579
    %v581 = vpop.f32.mrf.mxu0
    %v582 = vadd.f32 %v413, %v581
    %583 = vmatmul.bf16.gmra.mxu0 %v190
    %v584 = vpop.f32.mrf.mxu0
    %v585 = vadd.f32 %v416, %v584
    %v586 = vpop.f32.mrf.mxu0
    %v587 = vadd.f32 %v418, %v586
    %588 = vmatmul.bf16.gmra.mxu0 %v192
    %v589 = vpop.f32.mrf.mxu0
    %v590 = vadd.f32 %v421, %v589
    %v591 = vpop.f32.mrf.mxu0
    %v592 = vadd.f32 %v423, %v591
    %593 = vmatmul.bf16.gmra.mxu0 %v194
    %v594 = vpop.f32.mrf.mxu0
    %v595 = vadd.f32 %v426, %v594
    %v596 = vpop.f32.mrf.mxu0
    %v597 = vadd.f32 %v428, %v596
    %598 = vmatmul.bf16.gmra.mxu0 %v196
    %v599 = vpop.f32.mrf.mxu0
    %v600 = vadd.f32 %v431, %v599
    %v601 = vpop.f32.mrf.mxu0
    %v602 = vadd.f32 %v433, %v601
    %603 = vmatmul.bf16.gmra.mxu0 %v198
    %v604 = vpop.f32.mrf.mxu0
    %v605 = vadd.f32 %v436, %v604
    %v606 = vpop.f32.mrf.mxu0
    %v607 = vadd.f32 %v438, %v606
    %608 = vmatmul.bf16.gmra.mxu0 %v200
    %v609 = vpop.f32.mrf.mxu0
    %v610 = vadd.f32 %v441, %v609
    %v611 = vpop.f32.mrf.mxu0
    %v612 = vadd.f32 %v443, %v611
    %613 = vmatmul.bf16.gmra.mxu0 %v202
    %v614 = vpop.f32.mrf.mxu0
    %v615 = vadd.f32 %v446, %v614
    %v616 = vpop.f32.mrf.mxu0
    %v617 = vadd.f32 %v448, %v616
    %618 = vmatmul.bf16.gmra.mxu0 %v204
    %v619 = vpop.f32.mrf.mxu0
    %v620 = vadd.f32 %v451, %v619
    %v621 = vpop.f32.mrf.mxu0
    %v622 = vadd.f32 %v453, %v621
    %623 = vmatmul.bf16.gmra.mxu0 %v206
    %v624 = vpop.f32.mrf.mxu0
    %v625 = vadd.f32 %v456, %v624
    %v626 = vpop.f32.mrf.mxu0
    %v627 = vadd.f32 %v458, %v626
    %628 = vmatmul.bf16.gmra.mxu0 %v208
    %v629 = vpop.f32.mrf.mxu0
    %v630 = vadd.f32 %v461, %v629
    %v631 = vpop.f32.mrf.mxu0
    %v632 = vadd.f32 %v463, %v631
    %633 = vmatmul.bf16.gmra.mxu0 %v210
    %v634 = vpop.f32.mrf.mxu0
    %v635 = vadd.f32 %v466, %v634
    %v636 = vpop.f32.mrf.mxu0
    %v637 = vadd.f32 %v468, %v636
    %638 = vmatmul.bf16.gmra.mxu0 %v212
    %v639 = vpop.f32.mrf.mxu0
    %v640 = vadd.f32 %v471, %v639
    %v641 = vpop.f32.mrf.mxu0
    %v642 = vadd.f32 %v473, %v641
    %643 = vmatmul.bf16.gmra.mxu0 %v214
    %v644 = vpop.f32.mrf.mxu0
    %v645 = vadd.f32 %v476, %v644
    %v646 = vpop.f32.mrf.mxu0
    %v647 = vadd.f32 %v478, %v646
    %648 = vmatmul.bf16.gmra.mxu0 %v216
    %v649 = vpop.f32.mrf.mxu0
    %v650 = vadd.f32 %v481, %v649
    %v651 = vpop.f32.mrf.mxu0
    %v652 = vadd.f32 %v483, %v651
    %653 = vmatmul.bf16.gmra.mxu0 %v218
    %v654 = vpop.f32.mrf.mxu0
    %v655 = vadd.f32 %v486, %v654
    %v656 = vpop.f32.mrf.mxu0
    %v657 = vadd.f32 %v488, %v656
    %658 = vmatmul.bf16.gmra.mxu0 %v220
    %v659 = vpop.f32.mrf.mxu0
    %v660 = vadd.f32 %v491, %v659
    %v661 = vpop.f32.mrf.mxu0
    %v662 = vadd.f32 %v493, %v661
    %663 = vmatmul.bf16.gmra.mxu0 %v222
    %v664 = vpop.f32.mrf.mxu0
    %v665 = vadd.f32 %v496, %v664
    %v666 = vpop.f32.mrf.mxu0
    %v667 = vadd.f32 %v498, %v666
    %668 = vmatmul.bf16.gmra.mxu0 %v224
    %v669 = vpop.f32.mrf.mxu0
    %v670 = vadd.f32 %v501, %v669
    %v671 = vpop.f32.mrf.mxu0
    %v672 = vadd.f32 %v503, %v671
    %673 = vmatmul.bf16.gmra.mxu0 %v226
    %v674 = vpop.f32.mrf.mxu0
    %v675 = vadd.f32 %v506, %v674
    %v676 = vpop.f32.mrf.mxu0
    %v677 = vadd.f32 %v508, %v676
    %678 = vmatmul.bf16.gmra.mxu0 %v228
    %v679 = vpop.f32.mrf.mxu0
    %v680 = vadd.f32 %v511, %v679
    %v681 = vpop.f32.mrf.mxu0
    %v682 = vadd.f32 %v513, %v681
    %683 = vmatmul.bf16.gmra.mxu0 %v230
    %v684 = vpop.f32.mrf.mxu0
    %v685 = vadd.f32 %v516, %v684
    %v686 = vpop.f32.mrf.mxu0
    %v687 = vadd.f32 %v518, %v686
    %688 = vmatmul.bf16.gmra.mxu0 %v232
    %v689 = vpop.f32.mrf.mxu0
    %v690 = vadd.f32 %v521, %v689
    %v691 = vpop.f32.mrf.mxu0
    %v692 = vadd.f32 %v523, %v691
    %693 = vmatmul.bf16.gmra.mxu0 %v234
    %v694 = vpop.f32.mrf.mxu0
    %v695 = vadd.f32 %v526, %v694
    %v696 = vpop.f32.mrf.mxu0
    %v697 = vadd.f32 %v528, %v696
    %698 = vmatmul.bf16.gmra.mxu0 %v236
    %v699 = vpop.f32.mrf.mxu0
    %v700 = vadd.f32 %v531, %v699
    %v701 = vpop.f32.mrf.mxu0
    %v702 = vadd.f32 %v533, %v701
    %703 = vmatmul.bf16.gmra.mxu0 %v238
    %v704 = vpop.f32.mrf.mxu0
    %v705 = vadd.f32 %v536, %v704
    %v706 = vpop.f32.mrf.mxu0
    %v707 = vadd.f32 %v538, %v706
    %708 = vdwg.mxu0
    %709 = vst [vmem:[#allocation7] sm:$0xff] %v550
    %710 = vst [vmem:[#allocation7 + $0x8] sm:$0xff] %v552
    %711 = vst [vmem:[#allocation7 + $0x10] sm:$0xff] %v555
    %712 = vst [vmem:[#allocation7 + $0x18] sm:$0xff] %v557
    %713 = vst [vmem:[#allocation7 + $0x20] sm:$0xff] %v560
    %714 = vst [vmem:[#allocation7 + $0x28] sm:$0xff] %v562
    %715 = vst [vmem:[#allocation7 + $0x30] sm:$0xff] %v565
    %716 = vst [vmem:[#allocation7 + $0x38] sm:$0xff] %v567
    %717 = vst [vmem:[#allocation7 + $0x40] sm:$0xff] %v570
    %718 = vst [vmem:[#allocation7 + $0x48] sm:$0xff] %v572
    %719 = vst [vmem:[#allocation7 + $0x50] sm:$0xff] %v575
    %720 = vst [vmem:[#allocation7 + $0x58] sm:$0xff] %v577
    %721 = vst [vmem:[#allocation7 + $0x60] sm:$0xff] %v580
    %722 = vst [vmem:[#allocation7 + $0x68] sm:$0xff] %v582
    %723 = vst [vmem:[#allocation7 + $0x70] sm:$0xff] %v585
    %724 = vst [vmem:[#allocation7 + $0x78] sm:$0xff] %v587
    %725 = vst [vmem:[#allocation7 + $0x80] sm:$0xff] %v590
    %726 = vst [vmem:[#allocation7 + $0x88] sm:$0xff] %v592
    %727 = vst [vmem:[#allocation7 + $0x90] sm:$0xff] %v595
    %728 = vst [vmem:[#allocation7 + $0x98] sm:$0xff] %v597
    %729 = vst [vmem:[#allocation7 + $0xa0] sm:$0xff] %v600
    %730 = vst [vmem:[#allocation7 + $0xa8] sm:$0xff] %v602
    %731 = vst [vmem:[#allocation7 + $0xb0] sm:$0xff] %v605
    %732 = vst [vmem:[#allocation7 + $0xb8] sm:$0xff] %v607
    %733 = vst [vmem:[#allocation7 + $0xc0] sm:$0xff] %v610
    %734 = vst [vmem:[#allocation7 + $0xc8] sm:$0xff] %v612
    %735 = vst [vmem:[#allocation7 + $0xd0] sm:$0xff] %v615
    %736 = vst [vmem:[#allocation7 + $0xd8] sm:$0xff] %v617
    %737 = vst [vmem:[#allocation7 + $0xe0] sm:$0xff] %v620
    %738 = vst [vmem:[#allocation7 + $0xe8] sm:$0xff] %v622
    %739 = vst [vmem:[#allocation7 + $0xf0] sm:$0xff] %v625
    %740 = vst [vmem:[#allocation7 + $0xf8] sm:$0xff] %v627
    %741 = vst [vmem:[#allocation7 + $0x100] sm:$0xff] %v630
    %742 = vst [vmem:[#allocation7 + $0x108] sm:$0xff] %v632
    %743 = vst [vmem:[#allocation7 + $0x110] sm:$0xff] %v635
    %744 = vst [vmem:[#allocation7 + $0x118] sm:$0xff] %v637
    %745 = vst [vmem:[#allocation7 + $0x120] sm:$0xff] %v640
    %746 = vst [vmem:[#allocation7 + $0x128] sm:$0xff] %v642
    %747 = vst [vmem:[#allocation7 + $0x130] sm:$0xff] %v645
    %748 = vst [vmem:[#allocation7 + $0x138] sm:$0xff] %v647
    %749 = vst [vmem:[#allocation7 + $0x140] sm:$0xff] %v650
    %750 = vst [vmem:[#allocation7 + $0x148] sm:$0xff] %v652
    %751 = vst [vmem:[#allocation7 + $0x150] sm:$0xff] %v655
    %752 = vst [vmem:[#allocation7 + $0x158] sm:$0xff] %v657
    %753 = vst [vmem:[#allocation7 + $0x160] sm:$0xff] %v660
    %754 = vst [vmem:[#allocation7 + $0x168] sm:$0xff] %v662
    %755 = vst [vmem:[#allocation7 + $0x170] sm:$0xff] %v665
    %756 = vst [vmem:[#allocation7 + $0x178] sm:$0xff] %v667
    %757 = vst [vmem:[#allocation7 + $0x180] sm:$0xff] %v670
    %758 = vst [vmem:[#allocation7 + $0x188] sm:$0xff] %v672
    %759 = vst [vmem:[#allocation7 + $0x190] sm:$0xff] %v675
    %760 = vst [vmem:[#allocation7 + $0x198] sm:$0xff] %v677
    %761 = vst [vmem:[#allocation7 + $0x1a0] sm:$0xff] %v680
    %762 = vst [vmem:[#allocation7 + $0x1a8] sm:$0xff] %v682
    %763 = vst [vmem:[#allocation7 + $0x1b0] sm:$0xff] %v685
    %764 = vst [vmem:[#allocation7 + $0x1b8] sm:$0xff] %v687
    %765 = vst [vmem:[#allocation7 + $0x1c0] sm:$0xff] %v690
    %766 = vst [vmem:[#allocation7 + $0x1c8] sm:$0xff] %v692
    %767 = vst [vmem:[#allocation7 + $0x1d0] sm:$0xff] %v695
    %768 = vst [vmem:[#allocation7 + $0x1d8] sm:$0xff] %v697
    %769 = vst [vmem:[#allocation7 + $0x1e0] sm:$0xff] %v700
    %770 = vst [vmem:[#allocation7 + $0x1e8] sm:$0xff] %v702
    %771 = vst [vmem:[#allocation7 + $0x1f0] sm:$0xff] %v705
    %772 = vst [vmem:[#allocation7 + $0x1f8] sm:$0xff] %v707
    // Predicated region
    $region22: #{tpu_custom_call.1} parent=1 // pred_check
      _
    $region23: #{tpu_custom_call.1} parent=1 // pred_check_branch
      %774 = sbr.rel (0) target = $region25
    $region24: #{tpu_custom_call.1} parent=1 // pred_region
      %776 = vsyncadd [#allocation4], 0
      %s777 = sshll.u32 [#allocation7], 4
      %s778 = int_to_ptr.vmem [resolvable:$true] %s777
      %s779 = sshll.u32 %s3, 4
      %s780 = int_to_ptr.hbm [resolvable:$true] %s779
      %785 = dma.vmem_to_hbm [thread:$0]  %s778, 8192, %s780, [#allocation4], 128, 128, 8
    $region25: #{tpu_custom_call.1} parent=1 // pred_fallthru
      _
    // Predicated region
    $region26: #{tpu_custom_call.1} parent=1 // pred_check
      _
    $region27: #{tpu_custom_call.1} parent=1 // pred_check_branch
      %787 = sbr.rel (0) target = $region29
    $region28: #{tpu_custom_call.1} parent=1 // pred_region
      %789 = dma.done [#allocation4], 8192
    $region29: #{tpu_custom_call.1} parent=1 // pred_fallthru
      _
    %790 = vsyncpa [#allocation3], 1
    %791 = vsyncpa [#allocation6], 1
    %792 = vsyncpa [#allocation4], 1

// kernel: tpu_custom_call.1
$region0: #{tpu_custom_call.1}
  #allocation0 [shape = 'u32[]', space=smem, size = 0x4, offset = 0x4, fixed_abs, tag = 'smem constant byte address 0x4 - core index']
  #allocation1 [shape = 'u32[72,128]{1,0:T(1,128)}', space=vmem, size = 0x9000, scoped, tag = 'internal scratch']
  %s0 = inlined_call_operand.hbm [shape: f32[512,256], index: 0, kind: input, shape index: {}]
  %s1 = inlined_call_operand.hbm [shape: bf16[256,128], index: 1, kind: input, shape index: {}]
  %s2 = inlined_call_operand.vmem [shape: f32[1,128], index: 2, kind: input, shape index: {}]
  %s3 = inlined_call_operand.hbm [shape: f32[512,128], index: 3, kind: output, shape index: {}]
  %s4 = sld [smem:[#allocation0]]
  $region30: #{tpu_custom_call.1} parent=0
    _
  %s6 = ssub.s32 1, %s4
  %s7 = scalar_select 0, %s6, %s4
  $region1: #{tpu_custom_call.1} parent=0
    #allocation2 [shape = 'u8[524288]{0}', space=vmem, size = 0x80000, scoped, tag = 'input window, operand 0, single buffered']
    #allocation3 [shape = 's32[1]{0}', space=sflag, size = 0x4, scoped, tag = 'scoped memory for tpu_custom_call.1']
    #allocation4 [shape = 's32[1]{0}', space=sflag, size = 0x4, scoped, tag = 'scoped memory for tpu_custom_call.1']
    #allocation5 [shape = 'u8[65536]{0}', space=vmem, size = 0x10000, scoped, tag = 'input window, operand 1, single buffered']
    #allocation6 [shape = 's32[1]{0}', space=sflag, size = 0x4, scoped, tag = 'scoped memory for tpu_custom_call.1']
    #allocation7 [shape = 'u8[262144]{0}', space=vmem, size = 0x40000, scoped, tag = 'output window, operand 0, single buffered']
    %8 = vsyncpa [#allocation3], 0
    %9 = vsyncpa [#allocation6], 0
    %10 = vsyncpa [#allocation4], 0
    // Predicated region
    $region2: #{tpu_custom_call.1} parent=1 // pred_check
      _
    $region3: #{tpu_custom_call.1} parent=1 // pred_check_branch
      %12 = sbr.rel (0) target = $region5
    $region4: #{tpu_custom_call.1} parent=1 // pred_region
      %14 = vsyncadd [#allocation3], 0
      %s15 = sshll.u32 %s0, 4
      %s16 = int_to_ptr.hbm [resolvable:$true] %s15
      %s17 = sshll.u32 [#allocation2], 4
      %s18 = int_to_ptr.vmem [resolvable:$true] %s17
      %23 = dma.hbm_to_vmem [thread:$0]  %s16, 16384, %s18, [#allocation3], 256, 256, 16
    $region5: #{tpu_custom_call.1} parent=1 // pred_fallthru
      _
    // Predicated region
    $region6: #{tpu_custom_call.1} parent=1 // pred_check
      _
    $region7: #{tpu_custom_call.1} parent=1 // pred_check_branch
      %25 = sbr.rel (0) target = $region9
    $region8: #{tpu_custom_call.1} parent=1 // pred_region
      %27 = vsyncadd [#allocation6], 0
      %s28 = sshll.u32 %s1, 4
      %s29 = int_to_ptr.hbm [resolvable:$true] %s28
      %s30 = sshll.u32 [#allocation5], 4
      %s31 = int_to_ptr.vmem [resolvable:$true] %s30
      %36 = dma.hbm_to_vmem [thread:$0]  %s29, 2048, %s31, [#allocation6], 64, 64, 4
    $region9: #{tpu_custom_call.1} parent=1 // pred_fallthru
      _
    // Predicated region
    $region10: #{tpu_custom_call.1} parent=1 // pred_check
      _
    $region11: #{tpu_custom_call.1} parent=1 // pred_check_branch
      %38 = sbr.rel (0) target = $region13
    $region12: #{tpu_custom_call.1} parent=1 // pred_region
      _
    $region13: #{tpu_custom_call.1} parent=1 // pred_fallthru
      _
    // Predicated region
    $region14: #{tpu_custom_call.1} parent=1 // pred_check
      _
    $region15: #{tpu_custom_call.1} parent=1 // pred_check_branch
      %40 = sbr.rel (0) target = $region17
    $region16: #{tpu_custom_call.1} parent=1 // pred_region
      %42 = dma.done [#allocation3], 16384
    $region17: #{tpu_custom_call.1} parent=1 // pred_fallthru
      _
    // Predicated region
    $region18: #{tpu_custom_call.1} parent=1 // pred_check
      _
    $region19: #{tpu_custom_call.1} parent=1 // pred_check_branch
      %44 = sbr.rel (0) target = $region21
    $region20: #{tpu_custom_call.1} parent=1 // pred_region
      %46 = dma.done [#allocation6], 2048
    $region21: #{tpu_custom_call.1} parent=1 // pred_fallthru
      _
    %v47 = vld [vmem:[#allocation2] sm:$0xff]
    %v48 = vld [vmem:[#allocation2 + $0x8] sm:$0xff]
    %v49 = vld [vmem:[#allocation2 + $0x10] sm:$0xff]
    %v50 = vld [vmem:[#allocation2 + $0x18] sm:$0xff]
    %v51 = vld [vmem:[#allocation2 + $0x20] sm:$0xff]
    %v52 = vld [vmem:[#allocation2 + $0x28] sm:$0xff]
    %v53 = vld [vmem:[#allocation2 + $0x30] sm:$0xff]
    %v54 = vld [vmem:[#allocation2 + $0x38] sm:$0xff]
    %v55 = vld [vmem:[#allocation2 + $0x40] sm:$0xff]
    %v56 = vld [vmem:[#allocation2 + $0x48] sm:$0xff]
    %v57 = vld [vmem:[#allocation2 + $0x50] sm:$0xff]
    %v58 = vld [vmem:[#allocation2 + $0x58] sm:$0xff]
    %v59 = vld [vmem:[#allocation2 + $0x60] sm:$0xff]
    %v60 = vld [vmem:[#allocation2 + $0x68] sm:$0xff]
    %v61 = vld [vmem:[#allocation2 + $0x70] sm:$0xff]
    %v62 = vld [vmem:[#allocation2 + $0x78] sm:$0xff]
    %v63 = vld [vmem:[#allocation2 + $0x80] sm:$0xff]
    %v64 = vld [vmem:[#allocation2 + $0x88] sm:$0xff]
    %v65 = vld [vmem:[#allocation2 + $0x90] sm:$0xff]
    %v66 = vld [vmem:[#allocation2 + $0x98] sm:$0xff]
    %v67 = vld [vmem:[#allocation2 + $0xa0] sm:$0xff]
    %v68 = vld [vmem:[#allocation2 + $0xa8] sm:$0xff]
    %v69 = vld [vmem:[#allocation2 + $0xb0] sm:$0xff]
    %v70 = vld [vmem:[#allocation2 + $0xb8] sm:$0xff]
    %v71 = vld [vmem:[#allocation2 + $0xc0] sm:$0xff]
    %v72 = vld [vmem:[#allocation2 + $0xc8] sm:$0xff]
    %v73 = vld [vmem:[#allocation2 + $0xd0] sm:$0xff]
    %v74 = vld [vmem:[#allocation2 + $0xd8] sm:$0xff]
    %v75 = vld [vmem:[#allocation2 + $0xe0] sm:$0xff]
    %v76 = vld [vmem:[#allocation2 + $0xe8] sm:$0xff]
    %v77 = vld [vmem:[#allocation2 + $0xf0] sm:$0xff]
    %v78 = vld [vmem:[#allocation2 + $0xf8] sm:$0xff]
    %v79 = vld [vmem:[#allocation2 + $0x100] sm:$0xff]
    %v80 = vld [vmem:[#allocation2 + $0x108] sm:$0xff]
    %v81 = vld [vmem:[#allocation2 + $0x110] sm:$0xff]
    %v82 = vld [vmem:[#allocation2 + $0x118] sm:$0xff]
    %v83 = vld [vmem:[#allocation2 + $0x120] sm:$0xff]
    %v84 = vld [vmem:[#allocation2 + $0x128] sm:$0xff]
    %v85 = vld [vmem:[#allocation2 + $0x130] sm:$0xff]
    %v86 = vld [vmem:[#allocation2 + $0x138] sm:$0xff]
    %v87 = vld [vmem:[#allocation2 + $0x140] sm:$0xff]
    %v88 = vld [vmem:[#allocation2 + $0x148] sm:$0xff]
    %v89 = vld [vmem:[#allocation2 + $0x150] sm:$0xff]
    %v90 = vld [vmem:[#allocation2 + $0x158] sm:$0xff]
    %v91 = vld [vmem:[#allocation2 + $0x160] sm:$0xff]
    %v92 = vld [vmem:[#allocation2 + $0x168] sm:$0xff]
    %v93 = vld [vmem:[#allocation2 + $0x170] sm:$0xff]
    %v94 = vld [vmem:[#allocation2 + $0x178] sm:$0xff]
    %v95 = vld [vmem:[#allocation2 + $0x180] sm:$0xff]
    %v96 = vld [vmem:[#allocation2 + $0x188] sm:$0xff]
    %v97 = vld [vmem:[#allocation2 + $0x190] sm:$0xff]
    %v98 = vld [vmem:[#allocation2 + $0x198] sm:$0xff]
    %v99 = vld [vmem:[#allocation2 + $0x1a0] sm:$0xff]
    %v100 = vld [vmem:[#allocation2 + $0x1a8] sm:$0xff]
    %v101 = vld [vmem:[#allocation2 + $0x1b0] sm:$0xff]
    %v102 = vld [vmem:[#allocation2 + $0x1b8] sm:$0xff]
    %v103 = vld [vmem:[#allocation2 + $0x1c0] sm:$0xff]
    %v104 = vld [vmem:[#allocation2 + $0x1c8] sm:$0xff]
    %v105 = vld [vmem:[#allocation2 + $0x1d0] sm:$0xff]
    %v106 = vld [vmem:[#allocation2 + $0x1d8] sm:$0xff]
    %v107 = vld [vmem:[#allocation2 + $0x1e0] sm:$0xff]
    %v108 = vld [vmem:[#allocation2 + $0x1e8] sm:$0xff]
    %v109 = vld [vmem:[#allocation2 + $0x1f0] sm:$0xff]
    %v110 = vld [vmem:[#allocation2 + $0x1f8] sm:$0xff]
    %v111 = vld [vmem:[#allocation2 + $0x200] sm:$0xff]
    %v112 = vld [vmem:[#allocation2 + $0x208] sm:$0xff]
    %v113 = vld [vmem:[#allocation2 + $0x210] sm:$0xff]
    %v114 = vld [vmem:[#allocation2 + $0x218] sm:$0xff]
    %v115 = vld [vmem:[#allocation2 + $0x220] sm:$0xff]
    %v116 = vld [vmem:[#allocation2 + $0x228] sm:$0xff]
    %v117 = vld [vmem:[#allocation2 + $0x230] sm:$0xff]
    %v118 = vld [vmem:[#allocation2 + $0x238] sm:$0xff]
    %v119 = vld [vmem:[#allocation2 + $0x240] sm:$0xff]
    %v120 = vld [vmem:[#allocation2 + $0x248] sm:$0xff]
    %v121 = vld [vmem:[#allocation2 + $0x250] sm:$0xff]
    %v122 = vld [vmem:[#allocation2 + $0x258] sm:$0xff]
    %v123 = vld [vmem:[#allocation2 + $0x260] sm:$0xff]
    %v124 = vld [vmem:[#allocation2 + $0x268] sm:$0xff]
    %v125 = vld [vmem:[#allocation2 + $0x270] sm:$0xff]
    %v126 = vld [vmem:[#allocation2 + $0x278] sm:$0xff]
    %v127 = vld [vmem:[#allocation2 + $0x280] sm:$0xff]
    %v128 = vld [vmem:[#allocation2 + $0x288] sm:$0xff]
    %v129 = vld [vmem:[#allocation2 + $0x290] sm:$0xff]
    %v130 = vld [vmem:[#allocation2 + $0x298] sm:$0xff]
    %v131 = vld [vmem:[#allocation2 + $0x2a0] sm:$0xff]
    %v132 = vld [vmem:[#allocation2 + $0x2a8] sm:$0xff]
    %v133 = vld [vmem:[#allocation2 + $0x2b0] sm:$0xff]
    %v134 = vld [vmem:[#allocation2 + $0x2b8] sm:$0xff]
    %v135 = vld [vmem:[#allocation2 + $0x2c0] sm:$0xff]
    %v136 = vld [vmem:[#allocation2 + $0x2c8] sm:$0xff]
    %v137 = vld [vmem:[#allocation2 + $0x2d0] sm:$0xff]
    %v138 = vld [vmem:[#allocation2 + $0x2d8] sm:$0xff]
    %v139 = vld [vmem:[#allocation2 + $0x2e0] sm:$0xff]
    %v140 = vld [vmem:[#allocation2 + $0x2e8] sm:$0xff]
    %v141 = vld [vmem:[#allocation2 + $0x2f0] sm:$0xff]
    %v142 = vld [vmem:[#allocation2 + $0x2f8] sm:$0xff]
    %v143 = vld [vmem:[#allocation2 + $0x300] sm:$0xff]
    %v144 = vld [vmem:[#allocation2 + $0x308] sm:$0xff]
    %v145 = vld [vmem:[#allocation2 + $0x310] sm:$0xff]
    %v146 = vld [vmem:[#allocation2 + $0x318] sm:$0xff]
    %v147 = vld [vmem:[#allocation2 + $0x320] sm:$0xff]
    %v148 = vld [vmem:[#allocation2 + $0x328] sm:$0xff]
    %v149 = vld [vmem:[#allocation2 + $0x330] sm:$0xff]
    %v150 = vld [vmem:[#allocation2 + $0x338] sm:$0xff]
    %v151 = vld [vmem:[#allocation2 + $0x340] sm:$0xff]
    %v152 = vld [vmem:[#allocation2 + $0x348] sm:$0xff]
    %v153 = vld [vmem:[#allocation2 + $0x350] sm:$0xff]
    %v154 = vld [vmem:[#allocation2 + $0x358] sm:$0xff]
    %v155 = vld [vmem:[#allocation2 + $0x360] sm:$0xff]
    %v156 = vld [vmem:[#allocation2 + $0x368] sm:$0xff]
    %v157 = vld [vmem:[#allocation2 + $0x370] sm:$0xff]
    %v158 = vld [vmem:[#allocation2 + $0x378] sm:$0xff]
    %v159 = vld [vmem:[#allocation2 + $0x380] sm:$0xff]
    %v160 = vld [vmem:[#allocation2 + $0x388] sm:$0xff]
    %v161 = vld [vmem:[#allocation2 + $0x390] sm:$0xff]
    %v162 = vld [vmem:[#allocation2 + $0x398] sm:$0xff]
    %v163 = vld [vmem:[#allocation2 + $0x3a0] sm:$0xff]
    %v164 = vld [vmem:[#allocation2 + $0x3a8] sm:$0xff]
    %v165 = vld [vmem:[#allocation2 + $0x3b0] sm:$0xff]
    %v166 = vld [vmem:[#allocation2 + $0x3b8] sm:$0xff]
    %v167 = vld [vmem:[#allocation2 + $0x3c0] sm:$0xff]
    %v168 = vld [vmem:[#allocation2 + $0x3c8] sm:$0xff]
    %v169 = vld [vmem:[#allocation2 + $0x3d0] sm:$0xff]
    %v170 = vld [vmem:[#allocation2 + $0x3d8] sm:$0xff]
    %v171 = vld [vmem:[#allocation2 + $0x3e0] sm:$0xff]
    %v172 = vld [vmem:[#allocation2 + $0x3e8] sm:$0xff]
    %v173 = vld [vmem:[#allocation2 + $0x3f0] sm:$0xff]
    %v174 = vld [vmem:[#allocation2 + $0x3f8] sm:$0xff]
    %v175 = vpack.c.bf16 %v49, %v47
    %v176 = vpack.c.bf16 %v50, %v48
    %v177 = vpack.c.bf16 %v53, %v51
    %v178 = vpack.c.bf16 %v54, %v52
    %v179 = vpack.c.bf16 %v57, %v55
    %v180 = vpack.c.bf16 %v58, %v56
    %v181 = vpack.c.bf16 %v61, %v59
    %v182 = vpack.c.bf16 %v62, %v60
    %v183 = vpack.c.bf16 %v65, %v63
    %v184 = vpack.c.bf16 %v66, %v64
    %v185 = vpack.c.bf16 %v69, %v67
    %v186 = vpack.c.bf16 %v70, %v68
    %v187 = vpack.c.bf16 %v73, %v71
    %v188 = vpack.c.bf16 %v74, %v72
    %v189 = vpack.c.bf16 %v77, %v75
    %v190 = vpack.c.bf16 %v78, %v76
    %v191 = vpack.c.bf16 %v81, %v79
    %v192 = vpack.c.bf16 %v82, %v80
    %v193 = vpack.c.bf16 %v85, %v83
    %v194 = vpack.c.bf16 %v86, %v84
    %v195 = vpack.c.bf16 %v89, %v87
    %v196 = vpack.c.bf16 %v90, %v88
    %v197 = vpack.c.bf16 %v93, %v91
    %v198 = vpack.c.bf16 %v94, %v92
    %v199 = vpack.c.bf16 %v97, %v95
    %v200 = vpack.c.bf16 %v98, %v96
    %v201 = vpack.c.bf16 %v101, %v99
    %v202 = vpack.c.bf16 %v102, %v100
    %v203 = vpack.c.bf16 %v105, %v103
    %v204 = vpack.c.bf16 %v106, %v104
    %v205 = vpack.c.bf16 %v109, %v107
    %v206 = vpack.c.bf16 %v110, %v108
    %v207 = vpack.c.bf16 %v113, %v111
    %v208 = vpack.c.bf16 %v114, %v112
    %v209 = vpack.c.bf16 %v117, %v115
    %v210 = vpack.c.bf16 %v118, %v116
    %v211 = vpack.c.bf16 %v121, %v119
    %v212 = vpack.c.bf16 %v122, %v120
    %v213 = vpack.c.bf16 %v125, %v123
    %v214 = vpack.c.bf16 %v126, %v124
    %v215 = vpack.c.bf16 %v129, %v127
    %v216 = vpack.c.bf16 %v130, %v128
    %v217 = vpack.c.bf16 %v133, %v131
    %v218 = vpack.c.bf16 %v134, %v132
    %v219 = vpack.c.bf16 %v137, %v135
    %v220 = vpack.c.bf16 %v138, %v136
    %v221 = vpack.c.bf16 %v141, %v139
    %v222 = vpack.c.bf16 %v142, %v140
    %v223 = vpack.c.bf16 %v145, %v143
    %v224 = vpack.c.bf16 %v146, %v144
    %v225 = vpack.c.bf16 %v149, %v147
    %v226 = vpack.c.bf16 %v150, %v148
    %v227 = vpack.c.bf16 %v153, %v151
    %v228 = vpack.c.bf16 %v154, %v152
    %v229 = vpack.c.bf16 %v157, %v155
    %v230 = vpack.c.bf16 %v158, %v156
    %v231 = vpack.c.bf16 %v161, %v159
    %v232 = vpack.c.bf16 %v162, %v160
    %v233 = vpack.c.bf16 %v165, %v163
    %v234 = vpack.c.bf16 %v166, %v164
    %v235 = vpack.c.bf16 %v169, %v167
    %v236 = vpack.c.bf16 %v170, %v168
    %v237 = vpack.c.bf16 %v173, %v171
    %v238 = vpack.c.bf16 %v174, %v172
    %v239 = vld [vmem:[#allocation5] sm:$0xf]
    %v240 = vld [vmem:[#allocation5 + $0x4] sm:$0xf]
    %v241 = vld [vmem:[#allocation5 + $0x8] sm:$0xf]
    %v242 = vld [vmem:[#allocation5 + $0xc] sm:$0xf]
    %v243 = vld [vmem:[#allocation5 + $0x10] sm:$0xf]
    %v244 = vld [vmem:[#allocation5 + $0x14] sm:$0xf]
    %v245 = vld [vmem:[#allocation5 + $0x18] sm:$0xf]
    %v246 = vld [vmem:[#allocation5 + $0x1c] sm:$0xf]
    %v247 = vld [vmem:[#allocation5 + $0x20] sm:$0xf]
    %v248 = vld [vmem:[#allocation5 + $0x24] sm:$0xf]
    %v249 = vld [vmem:[#allocation5 + $0x28] sm:$0xf]
    %v250 = vld [vmem:[#allocation5 + $0x2c] sm:$0xf]
    %v251 = vld [vmem:[#allocation5 + $0x30] sm:$0xf]
    %v252 = vld [vmem:[#allocation5 + $0x34] sm:$0xf]
    %v253 = vld [vmem:[#allocation5 + $0x38] sm:$0xf]
    %v254 = vld [vmem:[#allocation5 + $0x3c] sm:$0xf]
    %v255 = vld [vmem:[#allocation5 + $0x40] sm:$0xf]
    %v256 = vld [vmem:[#allocation5 + $0x44] sm:$0xf]
    %v257 = vld [vmem:[#allocation5 + $0x48] sm:$0xf]
    %v258 = vld [vmem:[#allocation5 + $0x4c] sm:$0xf]
    %v259 = vld [vmem:[#allocation5 + $0x50] sm:$0xf]
    %v260 = vld [vmem:[#allocation5 + $0x54] sm:$0xf]
    %v261 = vld [vmem:[#allocation5 + $0x58] sm:$0xf]
    %v262 = vld [vmem:[#allocation5 + $0x5c] sm:$0xf]
    %v263 = vld [vmem:[#allocation5 + $0x60] sm:$0xf]
    %v264 = vld [vmem:[#allocation5 + $0x64] sm:$0xf]
    %v265 = vld [vmem:[#allocation5 + $0x68] sm:$0xf]
    %v266 = vld [vmem:[#allocation5 + $0x6c] sm:$0xf]
    %v267 = vld [vmem:[#allocation5 + $0x70] sm:$0xf]
    %v268 = vld [vmem:[#allocation5 + $0x74] sm:$0xf]
    %v269 = vld [vmem:[#allocation5 + $0x78] sm:$0xf]
    %v270 = vld [vmem:[#allocation5 + $0x7c] sm:$0xf]
    %v271 = vld [vmem:[%s2] sm:$0x1]
    %v273 = vperm.slane %v271, 0
    %v307 = vunpack.c.l.b16 %v239
    %v308 = vunpack.c.l.b16 %v240
    %v309 = vunpack.c.l.b16 %v241
    %v310 = vunpack.c.l.b16 %v242
    %v311 = vunpack.c.l.b16 %v243
    %v312 = vunpack.c.l.b16 %v244
    %v313 = vunpack.c.l.b16 %v245
    %v314 = vunpack.c.l.b16 %v246
    %v315 = vunpack.c.l.b16 %v247
    %v316 = vunpack.c.l.b16 %v248
    %v317 = vunpack.c.l.b16 %v249
    %v318 = vunpack.c.l.b16 %v250
    %v319 = vunpack.c.l.b16 %v251
    %v320 = vunpack.c.l.b16 %v252
    %v321 = vunpack.c.l.b16 %v253
    %v322 = vunpack.c.l.b16 %v254
    %v323 = vunpack.c.l.b16 %v255
    %v324 = vunpack.c.l.b16 %v256
    %v325 = vunpack.c.l.b16 %v257
    %v326 = vunpack.c.l.b16 %v258
    %v327 = vunpack.c.l.b16 %v259
    %v328 = vunpack.c.l.b16 %v260
    %v329 = vunpack.c.l.b16 %v261
    %v330 = vunpack.c.l.b16 %v262
    %v331 = vunpack.c.l.b16 %v263
    %v332 = vunpack.c.l.b16 %v264
    %v333 = vunpack.c.l.b16 %v265
    %v334 = vunpack.c.l.b16 %v266
    %v335 = vunpack.c.l.b16 %v267
    %v336 = vunpack.c.l.b16 %v268
    %v337 = vunpack.c.l.b16 %v269
    %v338 = vunpack.c.l.b16 %v270
    %v339 = vpack.c.b16 %v308, %v307
    %v340 = vpack.c.b16 %v310, %v309
    %v341 = vpack.c.b16 %v312, %v311
    %v342 = vpack.c.b16 %v314, %v313
    %v343 = vpack.c.b16 %v316, %v315
    %v344 = vpack.c.b16 %v318, %v317
    %v345 = vpack.c.b16 %v320, %v319
    %v346 = vpack.c.b16 %v322, %v321
    %v347 = vpack.c.b16 %v324, %v323
    %v348 = vpack.c.b16 %v326, %v325
    %v349 = vpack.c.b16 %v328, %v327
    %v350 = vpack.c.b16 %v330, %v329
    %v351 = vpack.c.b16 %v332, %v331
    %v352 = vpack.c.b16 %v334, %v333
    %v353 = vpack.c.b16 %v336, %v335
    %v354 = vpack.c.b16 %v338, %v337
    %371 = vmatpush.bf16.msra.mxu0 %v346
    %372 = vmatpush.bf16.msra.mxu0 %v345
    %373 = vmatpush.bf16.msra.mxu0 %v344
    %374 = vmatpush.bf16.msra.mxu0 %v343
    %375 = vmatpush.bf16.msra.mxu0 %v342
    %376 = vmatpush.bf16.msra.mxu0 %v341
    %377 = vmatpush.bf16.msra.mxu0 %v340
    %378 = vmatpush.bf16.msra.mxu0 %v339
    %379 = vmatmul.bf16.gmra.mxu0 %v175
    %v380 = vpop.f32.mrf.mxu0
    %v381 = vadd.f32 %v273, %v380
    %v382 = vpop.f32.mrf.mxu0
    %v383 = vadd.f32 %v273, %v382
    %384 = vmatmul.bf16.gmra.mxu0 %v177
    %v385 = vpop.f32.mrf.mxu0
    %v386 = vadd.f32 %v273, %v385
    %v387 = vpop.f32.mrf.mxu0
    %v388 = vadd.f32 %v273, %v387
    %389 = vmatmul.bf16.gmra.mxu0 %v179
    %v390 = vpop.f32.mrf.mxu0
    %v391 = vadd.f32 %v273, %v390
    %v392 = vpop.f32.mrf.mxu0
    %v393 = vadd.f32 %v273, %v392
    %394 = vmatmul.bf16.gmra.mxu0 %v181
    %v395 = vpop.f32.mrf.mxu0
    %v396 = vadd.f32 %v273, %v395
    %v397 = vpop.f32.mrf.mxu0
    %v398 = vadd.f32 %v273, %v397
    %399 = vmatmul.bf16.gmra.mxu0 %v183
    %v400 = vpop.f32.mrf.mxu0
    %v401 = vadd.f32 %v273, %v400
    %v402 = vpop.f32.mrf.mxu0
    %v403 = vadd.f32 %v273, %v402
    %404 = vmatmul.bf16.gmra.mxu0 %v185
    %v405 = vpop.f32.mrf.mxu0
    %v406 = vadd.f32 %v273, %v405
    %v407 = vpop.f32.mrf.mxu0
    %v408 = vadd.f32 %v273, %v407
    %409 = vmatmul.bf16.gmra.mxu0 %v187
    %v410 = vpop.f32.mrf.mxu0
    %v411 = vadd.f32 %v273, %v410
    %v412 = vpop.f32.mrf.mxu0
    %v413 = vadd.f32 %v273, %v412
    %414 = vmatmul.bf16.gmra.mxu0 %v189
    %v415 = vpop.f32.mrf.mxu0
    %v416 = vadd.f32 %v273, %v415
    %v417 = vpop.f32.mrf.mxu0
    %v418 = vadd.f32 %v273, %v417
    %419 = vmatmul.bf16.gmra.mxu0 %v191
    %v420 = vpop.f32.mrf.mxu0
    %v421 = vadd.f32 %v273, %v420
    %v422 = vpop.f32.mrf.mxu0
    %v423 = vadd.f32 %v273, %v422
    %424 = vmatmul.bf16.gmra.mxu0 %v193
    %v425 = vpop.f32.mrf.mxu0
    %v426 = vadd.f32 %v273, %v425
    %v427 = vpop.f32.mrf.mxu0
    %v428 = vadd.f32 %v273, %v427
    %429 = vmatmul.bf16.gmra.mxu0 %v195
    %v430 = vpop.f32.mrf.mxu0
    %v431 = vadd.f32 %v273, %v430
    %v432 = vpop.f32.mrf.mxu0
    %v433 = vadd.f32 %v273, %v432
    %434 = vmatmul.bf16.gmra.mxu0 %v197
    %v435 = vpop.f32.mrf.mxu0
    %v436 = vadd.f32 %v273, %v435
    %v437 = vpop.f32.mrf.mxu0
    %v438 = vadd.f32 %v273, %v437
    %439 = vmatmul.bf16.gmra.mxu0 %v199
    %v440 = vpop.f32.mrf.mxu0
    %v441 = vadd.f32 %v273, %v440
    %v442 = vpop.f32.mrf.mxu0
    %v443 = vadd.f32 %v273, %v442
    %444 = vmatmul.bf16.gmra.mxu0 %v201
    %v445 = vpop.f32.mrf.mxu0
    %v446 = vadd.f32 %v273, %v445
    %v447 = vpop.f32.mrf.mxu0
    %v448 = vadd.f32 %v273, %v447
    %449 = vmatmul.bf16.gmra.mxu0 %v203
    %v450 = vpop.f32.mrf.mxu0
    %v451 = vadd.f32 %v273, %v450
    %v452 = vpop.f32.mrf.mxu0
    %v453 = vadd.f32 %v273, %v452
    %454 = vmatmul.bf16.gmra.mxu0 %v205
    %v455 = vpop.f32.mrf.mxu0
    %v456 = vadd.f32 %v273, %v455
    %v457 = vpop.f32.mrf.mxu0
    %v458 = vadd.f32 %v273, %v457
    %459 = vmatmul.bf16.gmra.mxu0 %v207
    %v460 = vpop.f32.mrf.mxu0
    %v461 = vadd.f32 %v273, %v460
    %v462 = vpop.f32.mrf.mxu0
    %v463 = vadd.f32 %v273, %v462
    %464 = vmatmul.bf16.gmra.mxu0 %v209
    %v465 = vpop.f32.mrf.mxu0
    %v466 = vadd.f32 %v273, %v465
    %v467 = vpop.f32.mrf.mxu0
    %v468 = vadd.f32 %v273, %v467
    %469 = vmatmul.bf16.gmra.mxu0 %v211
    %v470 = vpop.f32.mrf.mxu0
    %v471 = vadd.f32 %v273, %v470
    %v472 = vpop.f32.mrf.mxu0
    %v473 = vadd.f32 %v273, %v472
    %474 = vmatmul.bf16.gmra.mxu0 %v213
    %v475 = vpop.f32.mrf.mxu0
    %v476 = vadd.f32 %v273, %v475
    %v477 = vpop.f32.mrf.mxu0
    %v478 = vadd.f32 %v273, %v477
    %479 = vmatmul.bf16.gmra.mxu0 %v215
    %v480 = vpop.f32.mrf.mxu0
    %v481 = vadd.f32 %v273, %v480
    %v482 = vpop.f32.mrf.mxu0
    %v483 = vadd.f32 %v273, %v482
    %484 = vmatmul.bf16.gmra.mxu0 %v217
    %v485 = vpop.f32.mrf.mxu0
    %v486 = vadd.f32 %v273, %v485
    %v487 = vpop.f32.mrf.mxu0
    %v488 = vadd.f32 %v273, %v487
    %489 = vmatmul.bf16.gmra.mxu0 %v219
    %v490 = vpop.f32.mrf.mxu0
    %v491 = vadd.f32 %v273, %v490
    %v492 = vpop.f32.mrf.mxu0
    %v493 = vadd.f32 %v273, %v492
    %494 = vmatmul.bf16.gmra.mxu0 %v221
    %v495 = vpop.f32.mrf.mxu0
    %v496 = vadd.f32 %v273, %v495
    %v497 = vpop.f32.mrf.mxu0
    %v498 = vadd.f32 %v273, %v497
    %499 = vmatmul.bf16.gmra.mxu0 %v223
    %v500 = vpop.f32.mrf.mxu0
    %v501 = vadd.f32 %v273, %v500
    %v502 = vpop.f32.mrf.mxu0
    %v503 = vadd.f32 %v273, %v502
    %504 = vmatmul.bf16.gmra.mxu0 %v225
    %v505 = vpop.f32.mrf.mxu0
    %v506 = vadd.f32 %v273, %v505
    %v507 = vpop.f32.mrf.mxu0
    %v508 = vadd.f32 %v273, %v507
    %509 = vmatmul.bf16.gmra.mxu0 %v227
    %v510 = vpop.f32.mrf.mxu0
    %v511 = vadd.f32 %v273, %v510
    %v512 = vpop.f32.mrf.mxu0
    %v513 = vadd.f32 %v273, %v512
    %514 = vmatmul.bf16.gmra.mxu0 %v229
    %v515 = vpop.f32.mrf.mxu0
    %v516 = vadd.f32 %v273, %v515
    %v517 = vpop.f32.mrf.mxu0
    %v518 = vadd.f32 %v273, %v517
    %519 = vmatmul.bf16.gmra.mxu0 %v231
    %v520 = vpop.f32.mrf.mxu0
    %v521 = vadd.f32 %v273, %v520
    %v522 = vpop.f32.mrf.mxu0
    %v523 = vadd.f32 %v273, %v522
    %524 = vmatmul.bf16.gmra.mxu0 %v233
    %v525 = vpop.f32.mrf.mxu0
    %v526 = vadd.f32 %v273, %v525
    %v527 = vpop.f32.mrf.mxu0
    %v528 = vadd.f32 %v273, %v527
    %529 = vmatmul.bf16.gmra.mxu0 %v235
    %v530 = vpop.f32.mrf.mxu0
    %v531 = vadd.f32 %v273, %v530
    %v532 = vpop.f32.mrf.mxu0
    %v533 = vadd.f32 %v273, %v532
    %534 = vmatmul.bf16.gmra.mxu0 %v237
    %v535 = vpop.f32.mrf.mxu0
    %v536 = vadd.f32 %v273, %v535
    %v537 = vpop.f32.mrf.mxu0
    %v538 = vadd.f32 %v273, %v537
    %539 = vdwg.mxu0
    %540 = vmatpush.bf16.msra.mxu0 %v354
    %541 = vmatpush.bf16.msra.mxu0 %v353
    %542 = vmatpush.bf16.msra.mxu0 %v352
    %543 = vmatpush.bf16.msra.mxu0 %v351
    %544 = vmatpush.bf16.msra.mxu0 %v350
    %545 = vmatpush.bf16.msra.mxu0 %v349
    %546 = vmatpush.bf16.msra.mxu0 %v348
    %547 = vmatpush.bf16.msra.mxu0 %v347
    %548 = vmatmul.bf16.gmra.mxu0 %v176
    %v549 = vpop.f32.mrf.mxu0
    %v550 = vadd.f32 %v381, %v549
    %v551 = vpop.f32.mrf.mxu0
    %v552 = vadd.f32 %v383, %v551
    %553 = vmatmul.bf16.gmra.mxu0 %v178
    %v554 = vpop.f32.mrf.mxu0
    %v555 = vadd.f32 %v386, %v554
    %v556 = vpop.f32.mrf.mxu0
    %v557 = vadd.f32 %v388, %v556
    %558 = vmatmul.bf16.gmra.mxu0 %v180
    %v559 = vpop.f32.mrf.mxu0
    %v560 = vadd.f32 %v391, %v559
    %v561 = vpop.f32.mrf.mxu0
    %v562 = vadd.f32 %v393, %v561
    %563 = vmatmul.bf16.gmra.mxu0 %v182
    %v564 = vpop.f32.mrf.mxu0
    %v565 = vadd.f32 %v396, %v564
    %v566 = vpop.f32.mrf.mxu0
    %v567 = vadd.f32 %v398, %v566
    %568 = vmatmul.bf16.gmra.mxu0 %v184
    %v569 = vpop.f32.mrf.mxu0
    %v570 = vadd.f32 %v401, %v569
    %v571 = vpop.f32.mrf.mxu0
    %v572 = vadd.f32 %v403, %v571
    %573 = vmatmul.bf16.gmra.mxu0 %v186
    %v574 = vpop.f32.mrf.mxu0
    %v575 = vadd.f32 %v406, %v574
    %v576 = vpop.f32.mrf.mxu0
    %v577 = vadd.f32 %v408, %v576
    %578 = vmatmul.bf16.gmra.mxu0 %v188
    %v579 = vpop.f32.mrf.mxu0
    %v580 = vadd.f32 %v411, %v579
    %v581 = vpop.f32.mrf.mxu0
    %v582 = vadd.f32 %v413, %v581
    %583 = vmatmul.bf16.gmra.mxu0 %v190
    %v584 = vpop.f32.mrf.mxu0
    %v585 = vadd.f32 %v416, %v584
    %v586 = vpop.f32.mrf.mxu0
    %v587 = vadd.f32 %v418, %v586
    %588 = vmatmul.bf16.gmra.mxu0 %v192
    %v589 = vpop.f32.mrf.mxu0
    %v590 = vadd.f32 %v421, %v589
    %v591 = vpop.f32.mrf.mxu0
    %v592 = vadd.f32 %v423, %v591
    %593 = vmatmul.bf16.gmra.mxu0 %v194
    %v594 = vpop.f32.mrf.mxu0
    %v595 = vadd.f32 %v426, %v594
    %v596 = vpop.f32.mrf.mxu0
    %v597 = vadd.f32 %v428, %v596
    %598 = vmatmul.bf16.gmra.mxu0 %v196
    %v599 = vpop.f32.mrf.mxu0
    %v600 = vadd.f32 %v431, %v599
    %v601 = vpop.f32.mrf.mxu0
    %v602 = vadd.f32 %v433, %v601
    %603 = vmatmul.bf16.gmra.mxu0 %v198
    %v604 = vpop.f32.mrf.mxu0
    %v605 = vadd.f32 %v436, %v604
    %v606 = vpop.f32.mrf.mxu0
    %v607 = vadd.f32 %v438, %v606
    %608 = vmatmul.bf16.gmra.mxu0 %v200
    %v609 = vpop.f32.mrf.mxu0
    %v610 = vadd.f32 %v441, %v609
    %v611 = vpop.f32.mrf.mxu0
    %v612 = vadd.f32 %v443, %v611
    %613 = vmatmul.bf16.gmra.mxu0 %v202
    %v614 = vpop.f32.mrf.mxu0
    %v615 = vadd.f32 %v446, %v614
    %v616 = vpop.f32.mrf.mxu0
    %v617 = vadd.f32 %v448, %v616
    %618 = vmatmul.bf16.gmra.mxu0 %v204
    %v619 = vpop.f32.mrf.mxu0
    %v620 = vadd.f32 %v451, %v619
    %v621 = vpop.f32.mrf.mxu0
    %v622 = vadd.f32 %v453, %v621
    %623 = vmatmul.bf16.gmra.mxu0 %v206
    %v624 = vpop.f32.mrf.mxu0
    %v625 = vadd.f32 %v456, %v624
    %v626 = vpop.f32.mrf.mxu0
    %v627 = vadd.f32 %v458, %v626
    %628 = vmatmul.bf16.gmra.mxu0 %v208
    %v629 = vpop.f32.mrf.mxu0
    %v630 = vadd.f32 %v461, %v629
    %v631 = vpop.f32.mrf.mxu0
    %v632 = vadd.f32 %v463, %v631
    %633 = vmatmul.bf16.gmra.mxu0 %v210
    %v634 = vpop.f32.mrf.mxu0
    %v635 = vadd.f32 %v466, %v634
    %v636 = vpop.f32.mrf.mxu0
    %v637 = vadd.f32 %v468, %v636
    %638 = vmatmul.bf16.gmra.mxu0 %v212
    %v639 = vpop.f32.mrf.mxu0
    %v640 = vadd.f32 %v471, %v639
    %v641 = vpop.f32.mrf.mxu0
    %v642 = vadd.f32 %v473, %v641
    %643 = vmatmul.bf16.gmra.mxu0 %v214
    %v644 = vpop.f32.mrf.mxu0
    %v645 = vadd.f32 %v476, %v644
    %v646 = vpop.f32.mrf.mxu0
    %v647 = vadd.f32 %v478, %v646
    %648 = vmatmul.bf16.gmra.mxu0 %v216
    %v649 = vpop.f32.mrf.mxu0
    %v650 = vadd.f32 %v481, %v649
    %v651 = vpop.f32.mrf.mxu0
    %v652 = vadd.f32 %v483, %v651
    %653 = vmatmul.bf16.gmra.mxu0 %v218
    %v654 = vpop.f32.mrf.mxu0
    %v655 = vadd.f32 %v486, %v654
    %v656 = vpop.f32.mrf.mxu0
    %v657 = vadd.f32 %v488, %v656
    %658 = vmatmul.bf16.gmra.mxu0 %v220
    %v659 = vpop.f32.mrf.mxu0
    %v660 = vadd.f32 %v491, %v659
    %v661 = vpop.f32.mrf.mxu0
    %v662 = vadd.f32 %v493, %v661
    %663 = vmatmul.bf16.gmra.mxu0 %v222
    %v664 = vpop.f32.mrf.mxu0
    %v665 = vadd.f32 %v496, %v664
    %v666 = vpop.f32.mrf.mxu0
    %v667 = vadd.f32 %v498, %v666
    %668 = vmatmul.bf16.gmra.mxu0 %v224
    %v669 = vpop.f32.mrf.mxu0
    %v670 = vadd.f32 %v501, %v669
    %v671 = vpop.f32.mrf.mxu0
    %v672 = vadd.f32 %v503, %v671
    %673 = vmatmul.bf16.gmra.mxu0 %v226
    %v674 = vpop.f32.mrf.mxu0
    %v675 = vadd.f32 %v506, %v674
    %v676 = vpop.f32.mrf.mxu0
    %v677 = vadd.f32 %v508, %v676
    %678 = vmatmul.bf16.gmra.mxu0 %v228
    %v679 = vpop.f32.mrf.mxu0
    %v680 = vadd.f32 %v511, %v679
    %v681 = vpop.f32.mrf.mxu0
    %v682 = vadd.f32 %v513, %v681
    %683 = vmatmul.bf16.gmra.mxu0 %v230
    %v684 = vpop.f32.mrf.mxu0
    %v685 = vadd.f32 %v516, %v684
    %v686 = vpop.f32.mrf.mxu0
    %v687 = vadd.f32 %v518, %v686
    %688 = vmatmul.bf16.gmra.mxu0 %v232
    %v689 = vpop.f32.mrf.mxu0
    %v690 = vadd.f32 %v521, %v689
    %v691 = vpop.f32.mrf.mxu0
    %v692 = vadd.f32 %v523, %v691
    %693 = vmatmul.bf16.gmra.mxu0 %v234
    %v694 = vpop.f32.mrf.mxu0
    %v695 = vadd.f32 %v526, %v694
    %v696 = vpop.f32.mrf.mxu0
    %v697 = vadd.f32 %v528, %v696
    %698 = vmatmul.bf16.gmra.mxu0 %v236
    %v699 = vpop.f32.mrf.mxu0
    %v700 = vadd.f32 %v531, %v699
    %v701 = vpop.f32.mrf.mxu0
    %v702 = vadd.f32 %v533, %v701
    %703 = vmatmul.bf16.gmra.mxu0 %v238
    %v704 = vpop.f32.mrf.mxu0
    %v705 = vadd.f32 %v536, %v704
    %v706 = vpop.f32.mrf.mxu0
    %v707 = vadd.f32 %v538, %v706
    %708 = vdwg.mxu0
    %709 = vst [vmem:[#allocation7] sm:$0xff] %v550
    %710 = vst [vmem:[#allocation7 + $0x8] sm:$0xff] %v552
    %711 = vst [vmem:[#allocation7 + $0x10] sm:$0xff] %v555
    %712 = vst [vmem:[#allocation7 + $0x18] sm:$0xff] %v557
    %713 = vst [vmem:[#allocation7 + $0x20] sm:$0xff] %v560
    %714 = vst [vmem:[#allocation7 + $0x28] sm:$0xff] %v562
    %715 = vst [vmem:[#allocation7 + $0x30] sm:$0xff] %v565
    %716 = vst [vmem:[#allocation7 + $0x38] sm:$0xff] %v567
    %717 = vst [vmem:[#allocation7 + $0x40] sm:$0xff] %v570
    %718 = vst [vmem:[#allocation7 + $0x48] sm:$0xff] %v572
    %719 = vst [vmem:[#allocation7 + $0x50] sm:$0xff] %v575
    %720 = vst [vmem:[#allocation7 + $0x58] sm:$0xff] %v577
    %721 = vst [vmem:[#allocation7 + $0x60] sm:$0xff] %v580
    %722 = vst [vmem:[#allocation7 + $0x68] sm:$0xff] %v582
    %723 = vst [vmem:[#allocation7 + $0x70] sm:$0xff] %v585
    %724 = vst [vmem:[#allocation7 + $0x78] sm:$0xff] %v587
    %725 = vst [vmem:[#allocation7 + $0x80] sm:$0xff] %v590
    %726 = vst [vmem:[#allocation7 + $0x88] sm:$0xff] %v592
    %727 = vst [vmem:[#allocation7 + $0x90] sm:$0xff] %v595
    %728 = vst [vmem:[#allocation7 + $0x98] sm:$0xff] %v597
    %729 = vst [vmem:[#allocation7 + $0xa0] sm:$0xff] %v600
    %730 = vst [vmem:[#allocation7 + $0xa8] sm:$0xff] %v602
    %731 = vst [vmem:[#allocation7 + $0xb0] sm:$0xff] %v605
    %732 = vst [vmem:[#allocation7 + $0xb8] sm:$0xff] %v607
    %733 = vst [vmem:[#allocation7 + $0xc0] sm:$0xff] %v610
    %734 = vst [vmem:[#allocation7 + $0xc8] sm:$0xff] %v612
    %735 = vst [vmem:[#allocation7 + $0xd0] sm:$0xff] %v615
    %736 = vst [vmem:[#allocation7 + $0xd8] sm:$0xff] %v617
    %737 = vst [vmem:[#allocation7 + $0xe0] sm:$0xff] %v620
    %738 = vst [vmem:[#allocation7 + $0xe8] sm:$0xff] %v622
    %739 = vst [vmem:[#allocation7 + $0xf0] sm:$0xff] %v625
    %740 = vst [vmem:[#allocation7 + $0xf8] sm:$0xff] %v627
    %741 = vst [vmem:[#allocation7 + $0x100] sm:$0xff] %v630
    %742 = vst [vmem:[#allocation7 + $0x108] sm:$0xff] %v632
    %743 = vst [vmem:[#allocation7 + $0x110] sm:$0xff] %v635
    %744 = vst [vmem:[#allocation7 + $0x118] sm:$0xff] %v637
    %745 = vst [vmem:[#allocation7 + $0x120] sm:$0xff] %v640
    %746 = vst [vmem:[#allocation7 + $0x128] sm:$0xff] %v642
    %747 = vst [vmem:[#allocation7 + $0x130] sm:$0xff] %v645
    %748 = vst [vmem:[#allocation7 + $0x138] sm:$0xff] %v647
    %749 = vst [vmem:[#allocation7 + $0x140] sm:$0xff] %v650
    %750 = vst [vmem:[#allocation7 + $0x148] sm:$0xff] %v652
    %751 = vst [vmem:[#allocation7 + $0x150] sm:$0xff] %v655
    %752 = vst [vmem:[#allocation7 + $0x158] sm:$0xff] %v657
    %753 = vst [vmem:[#allocation7 + $0x160] sm:$0xff] %v660
    %754 = vst [vmem:[#allocation7 + $0x168] sm:$0xff] %v662
    %755 = vst [vmem:[#allocation7 + $0x170] sm:$0xff] %v665
    %756 = vst [vmem:[#allocation7 + $0x178] sm:$0xff] %v667
    %757 = vst [vmem:[#allocation7 + $0x180] sm:$0xff] %v670
    %758 = vst [vmem:[#allocation7 + $0x188] sm:$0xff] %v672
    %759 = vst [vmem:[#allocation7 + $0x190] sm:$0xff] %v675
    %760 = vst [vmem:[#allocation7 + $0x198] sm:$0xff] %v677
    %761 = vst [vmem:[#allocation7 + $0x1a0] sm:$0xff] %v680
    %762 = vst [vmem:[#allocation7 + $0x1a8] sm:$0xff] %v682
    %763 = vst [vmem:[#allocation7 + $0x1b0] sm:$0xff] %v685
    %764 = vst [vmem:[#allocation7 + $0x1b8] sm:$0xff] %v687
    %765 = vst [vmem:[#allocation7 + $0x1c0] sm:$0xff] %v690
    %766 = vst [vmem:[#allocation7 + $0x1c8] sm:$0xff] %v692
    %767 = vst [vmem:[#allocation7 + $0x1d0] sm:$0xff] %v695
    %768 = vst [vmem:[#allocation7 + $0x1d8] sm:$0xff] %v697
    %769 = vst [vmem:[#allocation7 + $0x1e0] sm:$0xff] %v700
    %770 = vst [vmem:[#allocation7 + $0x1e8] sm:$0xff] %v702
    %771 = vst [vmem:[#allocation7 + $0x1f0] sm:$0xff] %v705
    %772 = vst [vmem:[#allocation7 + $0x1f8] sm:$0xff] %v707
    // Predicated region
    $region22: #{tpu_custom_call.1} parent=1 // pred_check
      _
    $region23: #{tpu_custom_call.1} parent=1 // pred_check_branch
      %774 = sbr.rel (0) target = $region25
    $region24: #{tpu_custom_call.1} parent=1 // pred_region
      %776 = vsyncadd [#allocation4], 0
      %s777 = sshll.u32 [#allocation7], 4
      %s778 = int_to_ptr.vmem [resolvable:$true] %s777
      %s779 = sshll.u32 %s3, 4
      %s780 = int_to_ptr.hbm [resolvable:$true] %s779
      %785 = dma.vmem_to_hbm [thread:$0]  %s778, 8192, %s780, [#allocation4], 128, 128, 8
    $region25: #{tpu_custom_call.1} parent=1 // pred_fallthru
      _
    // Predicated region
    $region26: #{tpu_custom_call.1} parent=1 // pred_check
      _
    $region27: #{tpu_custom_call.1} parent=1 // pred_check_branch
      %787 = sbr.rel (0) target = $region29
    $region28: #{tpu_custom_call.1} parent=1 // pred_region
      %789 = dma.done [#allocation4], 8192
    $region29: #{tpu_custom_call.1} parent=1 // pred_fallthru
      _
    %790 = vsyncpa [#allocation3], 1
    %791 = vsyncpa [#allocation6], 1
    %792 = vsyncpa [#allocation4], 1

</llo_original>
